<compile_context>
chip_gen: v6e
topology: v6e:2x2x1
jax: 0.10.0
libtpu: 0.0.40
codegen_flags: <defaults>
</compile_context>

<pallas_src>
import functools

import jax
import jax.numpy as jnp
from jax import lax
from jax.experimental import pallas as pl
from jax.experimental.pallas import tpu as pltpu


def attention_kernel(xq_ref, xkv_ref, wqkv_ref, wout_ref, o_ref,
                     q_scr, m_scr, l_scr, acc_scr,
                     *, heads, dim_head, scale, compute_dtype):
    """One (batch, q-tile, kv-tile) grid step of fused attention.

    xq_ref:   (1, TQ, D)   query-side activation tile
    xkv_ref:  (1, TK, D)   key/value-side activation tile
    wqkv_ref: (3, H, D, Dh) per-head Q/K/V projection weights
    wout_ref: (H, Dh, D)    per-head output projection weights
    o_ref:    (1, TQ, D)
    q_scr:    (H, TQ, Dh)  cached scaled-Q (compute dtype)
    m_scr:    (H, TQ, 1)   running max      (f32)
    l_scr:    (H, TQ, 1)   running sum      (f32)
    acc_scr:  (H, TQ, Dh)  running P@V acc  (f32)
    """
    ki = pl.program_id(2)
    nk = pl.num_programs(2)
    cd = compute_dtype

    x_kv = xkv_ref[0].astype(cd)                      # (TK, D)

    @pl.when(ki == 0)
    def _init():
        m_scr[...] = jnp.full_like(m_scr, -jnp.inf)
        l_scr[...] = jnp.zeros_like(l_scr)
        acc_scr[...] = jnp.zeros_like(acc_scr)
        x_q = xq_ref[0].astype(cd)                    # (TQ, D)
        for h in range(heads):                        # static unroll
            wq_h = wqkv_ref[0, h].astype(cd)          # (D, Dh)
            q_h = jnp.dot(x_q, wq_h,
                          preferred_element_type=jnp.float32) * scale
            q_scr[h] = q_h.astype(cd)                 # fold scale into Q once

    for h in range(heads):                            # static unroll
        wk_h = wqkv_ref[1, h].astype(cd)              # (D, Dh)
        wv_h = wqkv_ref[2, h].astype(cd)
        k_h = jnp.dot(x_kv, wk_h,
                      preferred_element_type=jnp.float32).astype(cd)  # (TK, Dh)
        v_h = jnp.dot(x_kv, wv_h,
                      preferred_element_type=jnp.float32).astype(cd)  # (TK, Dh)
        q_h = q_scr[h]                                # (TQ, Dh), compute dtype

        # scores = Q @ K^T without an explicit transpose relayout
        s = lax.dot_general(
            q_h, k_h,
            dimension_numbers=(((1,), (1,)), ((), ())),
            preferred_element_type=jnp.float32)       # (TQ, TK) f32

        m_prev = m_scr[h]                             # (TQ, 1)
        m_new = jnp.maximum(m_prev, jnp.max(s, axis=-1, keepdims=True))
        alpha = jnp.exp(m_prev - m_new)               # f32 softmax math
        p = jnp.exp(s - m_new)                        # (TQ, TK) f32
        l_scr[h] = alpha * l_scr[h] + jnp.sum(p, axis=-1, keepdims=True)
        acc_scr[h] = alpha * acc_scr[h] + jnp.dot(
            p.astype(cd), v_h, preferred_element_type=jnp.float32)
        m_scr[h] = m_new

    @pl.when(ki == nk - 1)
    def _finalize():
        tq = o_ref.shape[1]
        d = o_ref.shape[2]
        # per-head output-projection accumulation (no lane-misaligned concat)
        o_acc = jnp.zeros((tq, d), jnp.float32)
        for h in range(heads):
            inv_l = pl.reciprocal(l_scr[h], approx=True)      # EUP slot
            out_h = (acc_scr[h] * inv_l).astype(cd)           # (TQ, Dh)
            o_acc = o_acc + jnp.dot(out_h, wout_ref[h].astype(cd),
                                    preferred_element_type=jnp.float32)
        o_ref[0] = o_acc.astype(o_ref.dtype)


def _pick_tile(n, candidates=(512, 256, 128)):
    for c in candidates:
        if n % c == 0:
            return c
    return n  # full extent (always legal for the BlockSpec)


def attention_forward(x, w_qkv_t, w_out_t, *, heads, dim_head,
                      compute_dtype=None, q_tile=None, kv_tile=None):
    B, N, D = x.shape
    inner = heads * dim_head
    assert w_qkv_t.shape == (D, 3 * inner)
    assert w_out_t.shape == (inner, D)
    scale = dim_head ** -0.5
    if compute_dtype is None:
        compute_dtype = x.dtype

    TQ = q_tile if q_tile is not None else _pick_tile(N)
    TK = kv_tile if kv_tile is not None else _pick_tile(N)
    assert N % TQ == 0 and N % TK == 0

    # Per-head weight slabs: (3, H, D, Dh) and (H, Dh, D).
    w_qkv_h = w_qkv_t.reshape(D, 3, heads, dim_head).transpose(1, 2, 0, 3)
    w_out_h = w_out_t.reshape(heads, dim_head, D)

    kernel = functools.partial(
        attention_kernel, heads=heads, dim_head=dim_head, scale=scale,
        compute_dtype=compute_dtype)

    grid = (B, N // TQ, N // TK)

    return pl.pallas_call(
        kernel,
        out_shape=jax.ShapeDtypeStruct((B, N, D), x.dtype),
        grid_spec=pltpu.PrefetchScalarGridSpec(
            num_scalar_prefetch=0,
            grid=grid,
            in_specs=[
                # query-side activation tile
                pl.BlockSpec((1, TQ, D), lambda b, qi, ki: (b, qi, 0)),
                # key/value-side activation tile
                pl.BlockSpec((1, TK, D), lambda b, qi, ki: (b, ki, 0)),
                # weights stay resident (constant block index)
                pl.BlockSpec((3, heads, D, dim_head),
                             lambda b, qi, ki: (0, 0, 0, 0)),
                pl.BlockSpec((heads, dim_head, D),
                             lambda b, qi, ki: (0, 0, 0)),
            ],
            out_specs=pl.BlockSpec((1, TQ, D), lambda b, qi, ki: (b, qi, 0)),
            scratch_shapes=[
                pltpu.VMEM((heads, TQ, dim_head), compute_dtype),   # cached Q
                pltpu.VMEM((heads, TQ, 1), jnp.float32),            # m
                pltpu.VMEM((heads, TQ, 1), jnp.float32),            # l
                pltpu.VMEM((heads, TQ, dim_head), jnp.float32),     # acc
            ],
        ),
        compiler_params=pltpu.CompilerParams(
            dimension_semantics=("parallel", "parallel", "arbitrary"),
            vmem_limit_bytes=48 * 1024 * 1024,   # fits v7x's 64 MiB VMEM
        ),
    )(x, x, w_qkv_h, w_out_h)


def attention_reference(x, w_qkv_t, w_out_t, *, heads, dim_head):
    B, N, D = x.shape
    inner = heads * dim_head
    scale = dim_head ** -0.5
    qkv = jnp.einsum("bnd,de->bne", x, w_qkv_t)
    q, k, v = jnp.split(qkv, 3, axis=-1)

    def split_heads(t):
        return t.reshape(B, N, heads, dim_head).transpose(0, 2, 1, 3)

    q, k, v = map(split_heads, (q, k, v))
    dots = jnp.einsum("bhnd,bhmd->bhnm", q, k) * scale
    attn = jax.nn.softmax(dots, axis=-1)
    out = jnp.einsum("bhnm,bhmd->bhnd", attn, v)
    out = out.transpose(0, 2, 1, 3).reshape(B, N, inner)
    return jnp.einsum("bne,ed->bnd", out, w_out_t)


if __name__ == "__main__":
    key = jax.random.PRNGKey(0)

    # ---- test 1: tiny shapes (single KV tile) ------------------------------
    B, N, D = 2, 8, 32
    heads, dim_head = 2, 16
    inner = heads * dim_head
    kx, kq, ko, key = jax.random.split(key, 4)
    x = jax.random.normal(kx, (B, N, D), dtype=jnp.float32)
    w_qkv_t = jax.random.normal(kq, (D, 3 * inner), dtype=jnp.float32) * 0.05
    w_out_t = jax.random.normal(ko, (inner, D), dtype=jnp.float32) * 0.05

    out = attention_forward(x, w_qkv_t, w_out_t, heads=heads, dim_head=dim_head)
    out = jax.block_until_ready(out)
    ref = attention_reference(x, w_qkv_t, w_out_t, heads=heads, dim_head=dim_head)
    assert out.shape == (B, N, D)
    assert jnp.allclose(out, ref, atol=5e-3, rtol=5e-3), "mismatch vs reference (tiny)"

    # ---- test 2: exercises the tiled flash path (2 q-tiles x 2 kv-tiles) ---
    B2, N2, D2 = 2, 256, 64
    heads2, dim_head2 = 4, 32
    inner2 = heads2 * dim_head2
    kx2, kq2, ko2, key = jax.random.split(key, 4)
    x2 = jax.random.normal(kx2, (B2, N2, D2), dtype=jnp.float32)
    w_qkv_t2 = jax.random.normal(kq2, (D2, 3 * inner2), dtype=jnp.float32) * 0.05
    w_out_t2 = jax.random.normal(ko2, (inner2, D2), dtype=jnp.float32) * 0.05

    out2 = attention_forward(x2, w_qkv_t2, w_out_t2, heads=heads2,
                             dim_head=dim_head2, q_tile=128, kv_tile=128)
    out2 = jax.block_until_ready(out2)
    ref2 = attention_reference(x2, w_qkv_t2, w_out_t2, heads=heads2,
                               dim_head=dim_head2)
    assert jnp.allclose(out2, ref2, atol=5e-3, rtol=5e-3), "mismatch vs reference (tiled)"

    # ---- test 3: bf16 MXU operands, f32 accumulation / softmax -------------
    out_bf16 = attention_forward(x2, w_qkv_t2, w_out_t2, heads=heads2,
                                 dim_head=dim_head2, q_tile=128, kv_tile=128,
                                 compute_dtype=jnp.bfloat16)
    out_bf16 = jax.block_until_ready(out_bf16)
    assert jnp.allclose(out_bf16, ref2, atol=1e-1, rtol=1e-1), "mismatch vs reference (bf16)"

    print("KERNEL_OK")
</pallas_src>

<mosaic_0001>
module attributes {stable_mosaic.version = 11 : i64} {
  func.func @attention_kernel(%arg0: i32, %arg1: i32, %arg2: i32, %arg3: memref<1x8x32xf32, #tpu.memory_space<vmem>>, %arg4: memref<1x8x32xf32, #tpu.memory_space<vmem>>, %arg5: memref<3x2x32x16xf32, #tpu.memory_space<vmem>>, %arg6: memref<2x16x32xf32, #tpu.memory_space<vmem>>, %arg7: memref<1x8x32xf32, #tpu.memory_space<vmem>>, %arg8: memref<2x8x16xf32, #tpu.memory_space<vmem>>, %arg9: memref<2x8x1xf32, #tpu.memory_space<vmem>>, %arg10: memref<2x8x1xf32, #tpu.memory_space<vmem>>, %arg11: memref<2x8x16xf32, #tpu.memory_space<vmem>>) attributes {dimension_semantics = [#tpu.dimension_semantics<parallel>, #tpu.dimension_semantics<parallel>, #tpu.dimension_semantics<arbitrary>], iteration_bounds = array<i64: 2, 1, 1>, scalar_prefetch = 0 : i64, scratch_operands = 4 : i64, tpu.core_type = #tpu.core_type<tc>, window_params = [{transform_indices = @transform_0, window_bounds = array<i64: 1, 8, 32>}, {transform_indices = @transform_1, window_bounds = array<i64: 1, 8, 32>}, {pipeline_mode = #tpu.pipeline_mode<synchronous>, transform_indices = @transform_2, window_bounds = array<i64: 3, 2, 32, 16>}, {pipeline_mode = #tpu.pipeline_mode<synchronous>, transform_indices = @transform_3, window_bounds = array<i64: 2, 16, 32>}, {transform_indices = @transform_4, window_bounds = array<i64: 1, 8, 32>}]} {
    %c0 = arith.constant 0 : index
    %c0_0 = arith.constant 0 : index
    %c0_1 = arith.constant 0 : index
    %0 = vector.load %arg4[%c0, %c0_0, %c0_1] : memref<1x8x32xf32, #tpu.memory_space<vmem>>, vector<1x8x32xf32>
    %1 = vector.shape_cast %0 : vector<1x8x32xf32> to vector<8x32xf32>
    %c0_i32 = arith.constant 0 : i32
    %2 = arith.cmpi eq, %arg2, %c0_i32 : i32
    %3 = arith.extui %2 : i1 to i32
    %c0_i32_2 = arith.constant 0 : i32
    %4 = arith.cmpi ne, %3, %c0_i32_2 : i32
    scf.if %4 {
      %cst_72 = arith.constant 0xFF800000 : f32
      %88 = vector.broadcast %cst_72 : f32 to vector<2x8x1xf32>
      %c0_73 = arith.constant 0 : index
      %c0_74 = arith.constant 0 : index
      %c0_75 = arith.constant 0 : index
      %89 = vector.load %arg9[%c0_73, %c0_74, %c0_75] : memref<2x8x1xf32, #tpu.memory_space<vmem>>, vector<2x8x1xf32>
      tpu.vector_store %arg9[%c0_73, %c0_74, %c0_75], %88 {strides = array<i32>} : memref<2x8x1xf32, #tpu.memory_space<vmem>>, vector<2x8x1xf32>,
      %cst_76 = arith.constant 0.000000e+00 : f32
      %90 = vector.broadcast %cst_76 : f32 to vector<2x8x1xf32>
      %c0_77 = arith.constant 0 : index
      %c0_78 = arith.constant 0 : index
      %c0_79 = arith.constant 0 : index
      %91 = vector.load %arg10[%c0_77, %c0_78, %c0_79] : memref<2x8x1xf32, #tpu.memory_space<vmem>>, vector<2x8x1xf32>
      tpu.vector_store %arg10[%c0_77, %c0_78, %c0_79], %90 {strides = array<i32>} : memref<2x8x1xf32, #tpu.memory_space<vmem>>, vector<2x8x1xf32>,
      %cst_80 = arith.constant 0.000000e+00 : f32
      %92 = vector.broadcast %cst_80 : f32 to vector<2x8x16xf32>
      %c0_81 = arith.constant 0 : index
      %c0_82 = arith.constant 0 : index
      %c0_83 = arith.constant 0 : index
      %93 = vector.load %arg11[%c0_81, %c0_82, %c0_83] : memref<2x8x16xf32, #tpu.memory_space<vmem>>, vector<2x8x16xf32>
      tpu.vector_store %arg11[%c0_81, %c0_82, %c0_83], %92 {strides = array<i32>} : memref<2x8x16xf32, #tpu.memory_space<vmem>>, vector<2x8x16xf32>,
      %c0_84 = arith.constant 0 : index
      %c0_85 = arith.constant 0 : index
      %c0_86 = arith.constant 0 : index
      %94 = vector.load %arg3[%c0_84, %c0_85, %c0_86] : memref<1x8x32xf32, #tpu.memory_space<vmem>>, vector<1x8x32xf32>
      %95 = vector.shape_cast %94 : vector<1x8x32xf32> to vector<8x32xf32>
      %c0_87 = arith.constant 0 : index
      %c0_88 = arith.constant 0 : index
      %c0_89 = arith.constant 0 : index
      %c0_90 = arith.constant 0 : index
      %96 = vector.load %arg5[%c0_87, %c0_88, %c0_89, %c0_90] : memref<3x2x32x16xf32, #tpu.memory_space<vmem>>, vector<1x1x32x16xf32>
      %97 = vector.shape_cast %96 : vector<1x1x32x16xf32> to vector<32x16xf32>
      %cst_91 = arith.constant dense<0.000000e+00> : vector<8x16xf32>
      %98 = tpu.matmul %95, %97, %cst_91 {dimension_numbers = #tpu.dot_dimension_numbers<[1], [0], [0], [1], [0, 0, 1, 1], [], []>} : vector<8x32xf32>, vector<32x16xf32>, vector<8x16xf32> -> vector<8x16xf32>
      %cst_92 = arith.constant 2.500000e-01 : f32
      %99 = vector.broadcast %cst_92 : f32 to vector<8x16xf32>
      %100 = arith.mulf %98, %99 : vector<8x16xf32>
      %c0_93 = arith.constant 0 : index
      %c0_94 = arith.constant 0 : index
      %c0_95 = arith.constant 0 : index
      %101 = vector.load %arg8[%c0_93, %c0_94, %c0_95] : memref<2x8x16xf32, #tpu.memory_space<vmem>>, vector<1x8x16xf32>
      %102 = vector.shape_cast %101 : vector<1x8x16xf32> to vector<8x16xf32>
      %103 = vector.shape_cast %100 : vector<8x16xf32> to vector<1x8x16xf32>
      tpu.vector_store %arg8[%c0_93, %c0_94, %c0_95], %103 {strides = array<i32>} : memref<2x8x16xf32, #tpu.memory_space<vmem>>, vector<1x8x16xf32>,
      %c0_96 = arith.constant 0 : index
      %c1_97 = arith.constant 1 : index
      %c0_98 = arith.constant 0 : index
      %c0_99 = arith.constant 0 : index
      %104 = vector.load %arg5[%c0_96, %c1_97, %c0_98, %c0_99] : memref<3x2x32x16xf32, #tpu.memory_space<vmem>>, vector<1x1x32x16xf32>
      %105 = vector.shape_cast %104 : vector<1x1x32x16xf32> to vector<32x16xf32>
      %cst_100 = arith.constant dense<0.000000e+00> : vector<8x16xf32>
      %106 = tpu.matmul %95, %105, %cst_100 {dimension_numbers = #tpu.dot_dimension_numbers<[1], [0], [0], [1], [0, 0, 1, 1], [], []>} : vector<8x32xf32>, vector<32x16xf32>, vector<8x16xf32> -> vector<8x16xf32>
      %cst_101 = arith.constant 2.500000e-01 : f32
      %107 = vector.broadcast %cst_101 : f32 to vector<8x16xf32>
      %108 = arith.mulf %106, %107 : vector<8x16xf32>
      %c1_102 = arith.constant 1 : index
      %c0_103 = arith.constant 0 : index
      %c0_104 = arith.constant 0 : index
      %109 = vector.load %arg8[%c1_102, %c0_103, %c0_104] : memref<2x8x16xf32, #tpu.memory_space<vmem>>, vector<1x8x16xf32>
      %110 = vector.shape_cast %109 : vector<1x8x16xf32> to vector<8x16xf32>
      %111 = vector.shape_cast %108 : vector<8x16xf32> to vector<1x8x16xf32>
      tpu.vector_store %arg8[%c1_102, %c0_103, %c0_104], %111 {strides = array<i32>} : memref<2x8x16xf32, #tpu.memory_space<vmem>>, vector<1x8x16xf32>,
    } else {
    }
    %c1 = arith.constant 1 : index
    %c0_3 = arith.constant 0 : index
    %c0_4 = arith.constant 0 : index
    %c0_5 = arith.constant 0 : index
    %5 = vector.load %arg5[%c1, %c0_3, %c0_4, %c0_5] : memref<3x2x32x16xf32, #tpu.memory_space<vmem>>, vector<1x1x32x16xf32>
    %6 = vector.shape_cast %5 : vector<1x1x32x16xf32> to vector<32x16xf32>
    %c2 = arith.constant 2 : index
    %c0_6 = arith.constant 0 : index
    %c0_7 = arith.constant 0 : index
    %c0_8 = arith.constant 0 : index
    %7 = vector.load %arg5[%c2, %c0_6, %c0_7, %c0_8] : memref<3x2x32x16xf32, #tpu.memory_space<vmem>>, vector<1x1x32x16xf32>
    %8 = vector.shape_cast %7 : vector<1x1x32x16xf32> to vector<32x16xf32>
    %cst = arith.constant dense<0.000000e+00> : vector<8x16xf32>
    %9 = tpu.matmul %1, %6, %cst {dimension_numbers = #tpu.dot_dimension_numbers<[1], [0], [0], [1], [0, 0, 1, 1], [], []>} : vector<8x32xf32>, vector<32x16xf32>, vector<8x16xf32> -> vector<8x16xf32>
    %cst_9 = arith.constant dense<0.000000e+00> : vector<8x16xf32>
    %10 = tpu.matmul %1, %8, %cst_9 {dimension_numbers = #tpu.dot_dimension_numbers<[1], [0], [0], [1], [0, 0, 1, 1], [], []>} : vector<8x32xf32>, vector<32x16xf32>, vector<8x16xf32> -> vector<8x16xf32>
    %c0_10 = arith.constant 0 : index
    %c0_11 = arith.constant 0 : index
    %c0_12 = arith.constant 0 : index
    %11 = vector.load %arg8[%c0_10, %c0_11, %c0_12] : memref<2x8x16xf32, #tpu.memory_space<vmem>>, vector<1x8x16xf32>
    %12 = vector.shape_cast %11 : vector<1x8x16xf32> to vector<8x16xf32>
    %cst_13 = arith.constant dense<0.000000e+00> : vector<8x8xf32>
    %13 = tpu.matmul %12, %9, %cst_13 {dimension_numbers = #tpu.dot_dimension_numbers<[1], [1], [0], [0], [0, 0, 1, 0], [], []>} : vector<8x16xf32>, vector<8x16xf32>, vector<8x8xf32> -> vector<8x8xf32>
    %c0_14 = arith.constant 0 : index
    %c0_15 = arith.constant 0 : index
    %c0_16 = arith.constant 0 : index
    %14 = vector.load %arg9[%c0_14, %c0_15, %c0_16] : memref<2x8x1xf32, #tpu.memory_space<vmem>>, vector<1x8x1xf32>
    %15 = vector.shape_cast %14 : vector<1x8x1xf32> to vector<8x1xf32>
    %cst_17 = arith.constant dense<0xFF800000> : vector<8xf32>
    %16 = vector.multi_reduction <maximumf>, %13, %cst_17 [1] : vector<8x8xf32> to vector<8xf32>
    %17 = vector.shape_cast %16 : vector<8xf32> to vector<8x1xf32>
    %18 = arith.maximumf %15, %17 : vector<8x1xf32>
    %19 = arith.subf %15, %18 : vector<8x1xf32>
    %20 = math.exp %19 : vector<8x1xf32>
    %21 = vector.broadcast %18 : vector<8x1xf32> to vector<8x8xf32>
    %22 = arith.subf %13, %21 : vector<8x8xf32>
    %23 = math.exp %22 : vector<8x8xf32>
    %c0_18 = arith.constant 0 : index
    %c0_19 = arith.constant 0 : index
    %c0_20 = arith.constant 0 : index
    %24 = vector.load %arg10[%c0_18, %c0_19, %c0_20] : memref<2x8x1xf32, #tpu.memory_space<vmem>>, vector<1x8x1xf32>
    %25 = vector.shape_cast %24 : vector<1x8x1xf32> to vector<8x1xf32>
    %26 = arith.mulf %20, %25 : vector<8x1xf32>
    %cst_21 = arith.constant dense<0.000000e+00> : vector<8xf32>
    %27 = vector.multi_reduction <add>, %23, %cst_21 [1] : vector<8x8xf32> to vector<8xf32>
    %28 = vector.shape_cast %27 : vector<8xf32> to vector<8x1xf32>
    %29 = arith.addf %26, %28 : vector<8x1xf32>
    %c0_22 = arith.constant 0 : index
    %c0_23 = arith.constant 0 : index
    %c0_24 = arith.constant 0 : index
    %30 = vector.load %arg10[%c0_22, %c0_23, %c0_24] : memref<2x8x1xf32, #tpu.memory_space<vmem>>, vector<1x8x1xf32>
    %31 = vector.shape_cast %30 : vector<1x8x1xf32> to vector<8x1xf32>
    %32 = vector.shape_cast %29 : vector<8x1xf32> to vector<1x8x1xf32>
    tpu.vector_store %arg10[%c0_22, %c0_23, %c0_24], %32 {strides = array<i32>} : memref<2x8x1xf32, #tpu.memory_space<vmem>>, vector<1x8x1xf32>,
    %c0_25 = arith.constant 0 : index
    %c0_26 = arith.constant 0 : index
    %c0_27 = arith.constant 0 : index
    %33 = vector.load %arg11[%c0_25, %c0_26, %c0_27] : memref<2x8x16xf32, #tpu.memory_space<vmem>>, vector<1x8x16xf32>
    %34 = vector.shape_cast %33 : vector<1x8x16xf32> to vector<8x16xf32>
    %35 = vector.broadcast %20 : vector<8x1xf32> to vector<8x16xf32>
    %36 = arith.mulf %35, %34 : vector<8x16xf32>
    %cst_28 = arith.constant dense<0.000000e+00> : vector<8x16xf32>
    %37 = tpu.matmul %23, %10, %cst_28 {dimension_numbers = #tpu.dot_dimension_numbers<[1], [0], [0], [1], [0, 0, 1, 1], [], []>} : vector<8x8xf32>, vector<8x16xf32>, vector<8x16xf32> -> vector<8x16xf32>
    %38 = arith.addf %36, %37 : vector<8x16xf32>
    %c0_29 = arith.constant 0 : index
    %c0_30 = arith.constant 0 : index
    %c0_31 = arith.constant 0 : index
    %39 = vector.load %arg11[%c0_29, %c0_30, %c0_31] : memref<2x8x16xf32, #tpu.memory_space<vmem>>, vector<1x8x16xf32>
    %40 = vector.shape_cast %39 : vector<1x8x16xf32> to vector<8x16xf32>
    %41 = vector.shape_cast %38 : vector<8x16xf32> to vector<1x8x16xf32>
    tpu.vector_store %arg11[%c0_29, %c0_30, %c0_31], %41 {strides = array<i32>} : memref<2x8x16xf32, #tpu.memory_space<vmem>>, vector<1x8x16xf32>,
    %c0_32 = arith.constant 0 : index
    %c0_33 = arith.constant 0 : index
    %c0_34 = arith.constant 0 : index
    %42 = vector.load %arg9[%c0_32, %c0_33, %c0_34] : memref<2x8x1xf32, #tpu.memory_space<vmem>>, vector<1x8x1xf32>
    %43 = vector.shape_cast %42 : vector<1x8x1xf32> to vector<8x1xf32>
    %44 = vector.shape_cast %18 : vector<8x1xf32> to vector<1x8x1xf32>
    tpu.vector_store %arg9[%c0_32, %c0_33, %c0_34], %44 {strides = array<i32>} : memref<2x8x1xf32, #tpu.memory_space<vmem>>, vector<1x8x1xf32>,
    %c1_35 = arith.constant 1 : index
    %c1_36 = arith.constant 1 : index
    %c0_37 = arith.constant 0 : index
    %c0_38 = arith.constant 0 : index
    %45 = vector.load %arg5[%c1_35, %c1_36, %c0_37, %c0_38] : memref<3x2x32x16xf32, #tpu.memory_space<vmem>>, vector<1x1x32x16xf32>
    %46 = vector.shape_cast %45 : vector<1x1x32x16xf32> to vector<32x16xf32>
    %c2_39 = arith.constant 2 : index
    %c1_40 = arith.constant 1 : index
    %c0_41 = arith.constant 0 : index
    %c0_42 = arith.constant 0 : index
    %47 = vector.load %arg5[%c2_39, %c1_40, %c0_41, %c0_42] : memref<3x2x32x16xf32, #tpu.memory_space<vmem>>, vector<1x1x32x16xf32>
    %48 = vector.shape_cast %47 : vector<1x1x32x16xf32> to vector<32x16xf32>
    %cst_43 = arith.constant dense<0.000000e+00> : vector<8x16xf32>
    %49 = tpu.matmul %1, %46, %cst_43 {dimension_numbers = #tpu.dot_dimension_numbers<[1], [0], [0], [1], [0, 0, 1, 1], [], []>} : vector<8x32xf32>, vector<32x16xf32>, vector<8x16xf32> -> vector<8x16xf32>
    %cst_44 = arith.constant dense<0.000000e+00> : vector<8x16xf32>
    %50 = tpu.matmul %1, %48, %cst_44 {dimension_numbers = #tpu.dot_dimension_numbers<[1], [0], [0], [1], [0, 0, 1, 1], [], []>} : vector<8x32xf32>, vector<32x16xf32>, vector<8x16xf32> -> vector<8x16xf32>
    %c1_45 = arith.constant 1 : index
    %c0_46 = arith.constant 0 : index
    %c0_47 = arith.constant 0 : index
    %51 = vector.load %arg8[%c1_45, %c0_46, %c0_47] : memref<2x8x16xf32, #tpu.memory_space<vmem>>, vector<1x8x16xf32>
    %52 = vector.shape_cast %51 : vector<1x8x16xf32> to vector<8x16xf32>
    %cst_48 = arith.constant dense<0.000000e+00> : vector<8x8xf32>
    %53 = tpu.matmul %52, %49, %cst_48 {dimension_numbers = #tpu.dot_dimension_numbers<[1], [1], [0], [0], [0, 0, 1, 0], [], []>} : vector<8x16xf32>, vector<8x16xf32>, vector<8x8xf32> -> vector<8x8xf32>
    %c1_49 = arith.constant 1 : index
    %c0_50 = arith.constant 0 : index
    %c0_51 = arith.constant 0 : index
    %54 = vector.load %arg9[%c1_49, %c0_50, %c0_51] : memref<2x8x1xf32, #tpu.memory_space<vmem>>, vector<1x8x1xf32>
    %55 = vector.shape_cast %54 : vector<1x8x1xf32> to vector<8x1xf32>
    %cst_52 = arith.constant dense<0xFF800000> : vector<8xf32>
    %56 = vector.multi_reduction <maximumf>, %53, %cst_52 [1] : vector<8x8xf32> to vector<8xf32>
    %57 = vector.shape_cast %56 : vector<8xf32> to vector<8x1xf32>
    %58 = arith.maximumf %55, %57 : vector<8x1xf32>
    %59 = arith.subf %55, %58 : vector<8x1xf32>
    %60 = math.exp %59 : vector<8x1xf32>
    %61 = vector.broadcast %58 : vector<8x1xf32> to vector<8x8xf32>
    %62 = arith.subf %53, %61 : vector<8x8xf32>
    %63 = math.exp %62 : vector<8x8xf32>
    %c1_53 = arith.constant 1 : index
    %c0_54 = arith.constant 0 : index
    %c0_55 = arith.constant 0 : index
    %64 = vector.load %arg10[%c1_53, %c0_54, %c0_55] : memref<2x8x1xf32, #tpu.memory_space<vmem>>, vector<1x8x1xf32>
    %65 = vector.shape_cast %64 : vector<1x8x1xf32> to vector<8x1xf32>
    %66 = arith.mulf %60, %65 : vector<8x1xf32>
    %cst_56 = arith.constant dense<0.000000e+00> : vector<8xf32>
    %67 = vector.multi_reduction <add>, %63, %cst_56 [1] : vector<8x8xf32> to vector<8xf32>
    %68 = vector.shape_cast %67 : vector<8xf32> to vector<8x1xf32>
    %69 = arith.addf %66, %68 : vector<8x1xf32>
    %c1_57 = arith.constant 1 : index
    %c0_58 = arith.constant 0 : index
    %c0_59 = arith.constant 0 : index
    %70 = vector.load %arg10[%c1_57, %c0_58, %c0_59] : memref<2x8x1xf32, #tpu.memory_space<vmem>>, vector<1x8x1xf32>
    %71 = vector.shape_cast %70 : vector<1x8x1xf32> to vector<8x1xf32>
    %72 = vector.shape_cast %69 : vector<8x1xf32> to vector<1x8x1xf32>
    tpu.vector_store %arg10[%c1_57, %c0_58, %c0_59], %72 {strides = array<i32>} : memref<2x8x1xf32, #tpu.memory_space<vmem>>, vector<1x8x1xf32>,
    %c1_60 = arith.constant 1 : index
    %c0_61 = arith.constant 0 : index
    %c0_62 = arith.constant 0 : index
    %73 = vector.load %arg11[%c1_60, %c0_61, %c0_62] : memref<2x8x16xf32, #tpu.memory_space<vmem>>, vector<1x8x16xf32>
    %74 = vector.shape_cast %73 : vector<1x8x16xf32> to vector<8x16xf32>
    %75 = vector.broadcast %60 : vector<8x1xf32> to vector<8x16xf32>
    %76 = arith.mulf %75, %74 : vector<8x16xf32>
    %cst_63 = arith.constant dense<0.000000e+00> : vector<8x16xf32>
    %77 = tpu.matmul %63, %50, %cst_63 {dimension_numbers = #tpu.dot_dimension_numbers<[1], [0], [0], [1], [0, 0, 1, 1], [], []>} : vector<8x8xf32>, vector<8x16xf32>, vector<8x16xf32> -> vector<8x16xf32>
    %78 = arith.addf %76, %77 : vector<8x16xf32>
    %c1_64 = arith.constant 1 : index
    %c0_65 = arith.constant 0 : index
    %c0_66 = arith.constant 0 : index
    %79 = vector.load %arg11[%c1_64, %c0_65, %c0_66] : memref<2x8x16xf32, #tpu.memory_space<vmem>>, vector<1x8x16xf32>
    %80 = vector.shape_cast %79 : vector<1x8x16xf32> to vector<8x16xf32>
    %81 = vector.shape_cast %78 : vector<8x16xf32> to vector<1x8x16xf32>
    tpu.vector_store %arg11[%c1_64, %c0_65, %c0_66], %81 {strides = array<i32>} : memref<2x8x16xf32, #tpu.memory_space<vmem>>, vector<1x8x16xf32>,
    %c1_67 = arith.constant 1 : index
    %c0_68 = arith.constant 0 : index
    %c0_69 = arith.constant 0 : index
    %82 = vector.load %arg9[%c1_67, %c0_68, %c0_69] : memref<2x8x1xf32, #tpu.memory_space<vmem>>, vector<1x8x1xf32>
    %83 = vector.shape_cast %82 : vector<1x8x1xf32> to vector<8x1xf32>
    %84 = vector.shape_cast %58 : vector<8x1xf32> to vector<1x8x1xf32>
    tpu.vector_store %arg9[%c1_67, %c0_68, %c0_69], %84 {strides = array<i32>} : memref<2x8x1xf32, #tpu.memory_space<vmem>>, vector<1x8x1xf32>,
    %c0_i32_70 = arith.constant 0 : i32
    %85 = arith.cmpi eq, %arg2, %c0_i32_70 : i32
    %86 = arith.extui %85 : i1 to i32
    %c0_i32_71 = arith.constant 0 : i32
    %87 = arith.cmpi ne, %86, %c0_i32_71 : i32
    scf.if %87 {
      %cst_72 = arith.constant 0.000000e+00 : f32
      %88 = vector.broadcast %cst_72 : f32 to vector<8x32xf32>
      %c0_73 = arith.constant 0 : index
      %c0_74 = arith.constant 0 : index
      %c0_75 = arith.constant 0 : index
      %89 = vector.load %arg10[%c0_73, %c0_74, %c0_75] : memref<2x8x1xf32, #tpu.memory_space<vmem>>, vector<1x8x1xf32>
      %90 = vector.shape_cast %89 : vector<1x8x1xf32> to vector<8x1xf32>
      %91 = tpu.reciprocal %90 {approx = true} : vector<8x1xf32> -> vector<8x1xf32>
      %c0_76 = arith.constant 0 : index
      %c0_77 = arith.constant 0 : index
      %c0_78 = arith.constant 0 : index
      %92 = vector.load %arg11[%c0_76, %c0_77, %c0_78] : memref<2x8x16xf32, #tpu.memory_space<vmem>>, vector<1x8x16xf32>
      %93 = vector.shape_cast %92 : vector<1x8x16xf32> to vector<8x16xf32>
      %94 = vector.broadcast %91 : vector<8x1xf32> to vector<8x16xf32>
      %95 = arith.mulf %93, %94 : vector<8x16xf32>
      %c0_79 = arith.constant 0 : index
      %c0_80 = arith.constant 0 : index
      %c0_81 = arith.constant 0 : index
      %96 = vector.load %arg6[%c0_79, %c0_80, %c0_81] : memref<2x16x32xf32, #tpu.memory_space<vmem>>, vector<1x16x32xf32>
      %97 = vector.shape_cast %96 : vector<1x16x32xf32> to vector<16x32xf32>
      %cst_82 = arith.constant dense<0.000000e+00> : vector<8x32xf32>
      %98 = tpu.matmul %95, %97, %cst_82 {dimension_numbers = #tpu.dot_dimension_numbers<[1], [0], [0], [1], [0, 0, 1, 1], [], []>} : vector<8x16xf32>, vector<16x32xf32>, vector<8x32xf32> -> vector<8x32xf32>
      %99 = arith.addf %88, %98 : vector<8x32xf32>
      %c1_83 = arith.constant 1 : index
      %c0_84 = arith.constant 0 : index
      %c0_85 = arith.constant 0 : index
      %100 = vector.load %arg10[%c1_83, %c0_84, %c0_85] : memref<2x8x1xf32, #tpu.memory_space<vmem>>, vector<1x8x1xf32>
      %101 = vector.shape_cast %100 : vector<1x8x1xf32> to vector<8x1xf32>
      %102 = tpu.reciprocal %101 {approx = true} : vector<8x1xf32> -> vector<8x1xf32>
      %c1_86 = arith.constant 1 : index
      %c0_87 = arith.constant 0 : index
      %c0_88 = arith.constant 0 : index
      %103 = vector.load %arg11[%c1_86, %c0_87, %c0_88] : memref<2x8x16xf32, #tpu.memory_space<vmem>>, vector<1x8x16xf32>
      %104 = vector.shape_cast %103 : vector<1x8x16xf32> to vector<8x16xf32>
      %105 = vector.broadcast %102 : vector<8x1xf32> to vector<8x16xf32>
      %106 = arith.mulf %104, %105 : vector<8x16xf32>
      %c1_89 = arith.constant 1 : index
      %c0_90 = arith.constant 0 : index
      %c0_91 = arith.constant 0 : index
      %107 = vector.load %arg6[%c1_89, %c0_90, %c0_91] : memref<2x16x32xf32, #tpu.memory_space<vmem>>, vector<1x16x32xf32>
      %108 = vector.shape_cast %107 : vector<1x16x32xf32> to vector<16x32xf32>
      %cst_92 = arith.constant dense<0.000000e+00> : vector<8x32xf32>
      %109 = tpu.matmul %106, %108, %cst_92 {dimension_numbers = #tpu.dot_dimension_numbers<[1], [0], [0], [1], [0, 0, 1, 1], [], []>} : vector<8x16xf32>, vector<16x32xf32>, vector<8x32xf32> -> vector<8x32xf32>
      %110 = arith.addf %99, %109 : vector<8x32xf32>
      %c0_93 = arith.constant 0 : index
      %c0_94 = arith.constant 0 : index
      %c0_95 = arith.constant 0 : index
      %111 = vector.load %arg7[%c0_93, %c0_94, %c0_95] : memref<1x8x32xf32, #tpu.memory_space<vmem>>, vector<1x8x32xf32>
      %112 = vector.shape_cast %111 : vector<1x8x32xf32> to vector<8x32xf32>
      %113 = vector.shape_cast %110 : vector<8x32xf32> to vector<1x8x32xf32>
      tpu.vector_store %arg7[%c0_93, %c0_94, %c0_95], %113 {strides = array<i32>} : memref<1x8x32xf32, #tpu.memory_space<vmem>>, vector<1x8x32xf32>,
    } else {
    }
    return
  }
  func.func @transform_0(%arg0: i32, %arg1: i32, %arg2: i32) -> (i32, i32, i32) {
    %c0_i32 = arith.constant 0 : i32
    %c0_i32_0 = arith.constant 0 : i32
    return %arg0, %arg1, %c0_i32 : i32, i32, i32
  }
  func.func @transform_1(%arg0: i32, %arg1: i32, %arg2: i32) -> (i32, i32, i32) {
    %c0_i32 = arith.constant 0 : i32
    %c0_i32_0 = arith.constant 0 : i32
    return %arg0, %arg2, %c0_i32 : i32, i32, i32
  }
  func.func @transform_2(%arg0: i32, %arg1: i32, %arg2: i32) -> (i32, i32, i32, i32) {
    %c0_i32 = arith.constant 0 : i32
    %c0_i32_0 = arith.constant 0 : i32
    %c0_i32_1 = arith.constant 0 : i32
    %c0_i32_2 = arith.constant 0 : i32
    %c0_i32_3 = arith.constant 0 : i32
    return %c0_i32, %c0_i32_0, %c0_i32_1, %c0_i32_2 : i32, i32, i32, i32
  }
  func.func @transform_3(%arg0: i32, %arg1: i32, %arg2: i32) -> (i32, i32, i32) {
    %c0_i32 = arith.constant 0 : i32
    %c0_i32_0 = arith.constant 0 : i32
    %c0_i32_1 = arith.constant 0 : i32
    %c0_i32_2 = arith.constant 0 : i32
    return %c0_i32, %c0_i32_0, %c0_i32_1 : i32, i32, i32
  }
  func.func @transform_4(%arg0: i32, %arg1: i32, %arg2: i32) -> (i32, i32, i32) {
    %c0_i32 = arith.constant 0 : i32
    %c0_i32_0 = arith.constant 0 : i32
    return %arg0, %arg1, %c0_i32 : i32, i32, i32
  }
}

</mosaic_0001>

<llo_original>
// kernel: tpu_custom_call.1
$region0: #{tpu_custom_call.1}
  #allocation0 [shape = 'u32[]', space=smem, size = 0x4, offset = 0x4, fixed_abs, tag = 'smem constant byte address 0x4 - core index']
  #allocation1 [shape = 'u32[144,128]{1,0:T(1,128)}', space=vmem, size = 0x12000, scoped, tag = 'internal scratch']
  #allocation2 [shape = 'f32[2,8,16]{2,1,0:T(8,128)}', space=vmem, size = 0x2000, scoped, tag = 'scratch operand']
  #allocation3 [shape = 'f32[2,8,1]{2,1,0:T(8,128)}', space=vmem, size = 0x2000, scoped, tag = 'scratch operand']
  #allocation4 [shape = 'f32[2,8,1]{2,1,0:T(8,128)}', space=vmem, size = 0x2000, scoped, tag = 'scratch operand']
  #allocation5 [shape = 'f32[2,8,16]{2,1,0:T(8,128)}', space=vmem, size = 0x2000, scoped, tag = 'scratch operand']
  %s0 = inlined_call_operand.vmem [shape: f32[2,8,32], index: 0, kind: input, shape index: {}]
  %s1 = inlined_call_operand.vmem [shape: f32[2,8,32], index: 1, kind: input, shape index: {}]
  %s2 = inlined_call_operand.vmem [shape: f32[3,2,32,16], index: 2, kind: input, shape index: {}]
  %s3 = inlined_call_operand.vmem [shape: f32[2,16,32], index: 3, kind: input, shape index: {}]
  %s4 = inlined_call_operand.hbm [shape: f32[2,8,32], index: 4, kind: output, shape index: {}]
  %s5 = sld [smem:[#allocation0]]
  $region57: #{tpu_custom_call.1} parent=0
    _
  %s7 = ssub.s32 1, %s5
  %s8 = scalar_select 0, %s7, %s5
  $region1: #{tpu_custom_call.1} parent=0
    #allocation6 [shape = 'u8[8192]{0}', space=vmem, size = 0x2000, scoped, tag = 'output window, operand 0']
    #allocation7 [shape = 's32[2]{0}', space=sflag, size = 0x8, scoped, tag = 'scoped memory for tpu_custom_call.1']
    %9 = vsyncpa [#allocation7], 0
    %s10 = scalar_lea.sflag [#allocation7], 1
    %11 = vsyncpa %s10, 0
    loop: start=0, step=1, limit=4
    $region2: #{tpu_custom_call.1} parent=1 // loop_pre_header
      _
    $region3: #{tpu_custom_call.1} parent=1 // loop_header
      %s13 = sphi 0, %s17
      %p14 = scmp.ge.s32.totalorder %s13, 4
      %s20 = sphi 0, %s39
      %s21 = sphi 0, %s35
      %s22 = sphi 0, %s31
      %s23 = sphi 0, %s20
      %s24 = sphi 0, %s21
      %s25 = sphi 0, %s22
      %s26 = sphi 0, %s23
      %s27 = sphi 0, %s24
      %s28 = sphi 0, %s25
      %s44 = sphi 0, %s46
      %s47 = sphi 0, %s44
      %s48 = sphi 0, %s47
      %s64 = sphi 0, %s48
      %s72 = sphi 0, %s74
      %s75 = sphi 0, %s72
      %s76 = sphi 0, %s75
      %s92 = sphi 0, %s76
      %s96 = sphi 0, %s96
      %s98 = sphi 0, %s96
      %s99 = sphi 0, %s98
      %s113 = sphi 0, %s99
      %s117 = sphi 0, %s117
      %s119 = sphi 0, %s117
      %s120 = sphi 0, %s119
      %s134 = sphi 0, %s120
      %s142 = sphi 0, %s144
      %s145 = sphi 0, %s142
      %s146 = sphi 0, %s145
      %s162 = sphi 0, %s146
    $region4: #{tpu_custom_call.1} parent=1 // loop_header_branch
      %16 = sbr.rel (%p14) target = $region8
    $region5: #{tpu_custom_call.1} parent=1 // loop_body
      %s18 = ssub.s32 %s13, 1
      %s19 = ssub.s32 %s13, 2
      %s29 = sadd.s32 1, %s22
      %p30 = scmp.ge.s32.totalorder %s29, 1
      %s31 = scalar_select %p30, 0, %s29
      %s32 = sadd.s32 1, %s21
      %s33 = scalar_select %p30, %s32, %s21
      %p34 = scmp.ge.s32.totalorder %s33, 1
      %s35 = scalar_select %p34, 0, %s33
      %s36 = sadd.s32 1, %s20
      %s37 = scalar_select %p34, %s36, %s20
      %p38 = scmp.ge.s32.totalorder %s37, 2
      %s39 = scalar_select %p38, 0, %s37
      %s40 = ssub.s32 %s20, %s39
      %s41 = ssub.s32 %s21, %s35
      %s42 = sor.u32 %s40, %s41
      %p43 = scmp.eq.s32.totalorder %s42, 0
      %s45 = sadd.s32 %s44, 1
      %s46 = scalar_select %p43, %s44, %s45
      %p49 = pneg %p43
      %p50 = scmp.eq.s32.totalorder %s13, 1
      %p51 = por %p49, %p50
      %p52 = scmp.ne.s32.totalorder %s44, %s47
      %p53 = scmp.eq.s32.totalorder %s13, 0
      %p54 = por %p52, %p53
      %p55 = scmp.ne.s32.totalorder %s44, %s47
      %p56 = scmp.eq.s32.totalorder %s18, 1
      %p57 = por %p55, %p56
      %p58 = scmp.ne.s32.totalorder %s47, %s48
      %p59 = scmp.eq.s32.totalorder %s18, 0
      %p60 = por %p58, %p59
      %p61 = scmp.ne.s32.totalorder %s47, %s48
      %p62 = scmp.eq.s32.totalorder %s19, 1
      %p63 = por %p61, %p62
      %p65 = scmp.ne.s32.totalorder %s48, %s64
      %p66 = scmp.eq.s32.totalorder %s19, 0
      %p67 = por %p65, %p66
      %s68 = ssub.s32 %s20, %s39
      %s69 = ssub.s32 %s22, %s31
      %s70 = sor.u32 %s68, %s69
      %p71 = scmp.eq.s32.totalorder %s70, 0
      %s73 = sadd.s32 %s72, 1
      %s74 = scalar_select %p71, %s72, %s73
      %p77 = pneg %p71
      %p78 = scmp.eq.s32.totalorder %s13, 1
      %p79 = por %p77, %p78
      %p80 = scmp.ne.s32.totalorder %s72, %s75
      %p81 = scmp.eq.s32.totalorder %s13, 0
      %p82 = por %p80, %p81
      %p83 = scmp.ne.s32.totalorder %s72, %s75
      %p84 = scmp.eq.s32.totalorder %s18, 1
      %p85 = por %p83, %p84
      %p86 = scmp.ne.s32.totalorder %s75, %s76
      %p87 = scmp.eq.s32.totalorder %s18, 0
      %p88 = por %p86, %p87
      %p89 = scmp.ne.s32.totalorder %s75, %s76
      %p90 = scmp.eq.s32.totalorder %s19, 1
      %p91 = por %p89, %p90
      %p93 = scmp.ne.s32.totalorder %s76, %s92
      %p94 = scmp.eq.s32.totalorder %s19, 0
      %p95 = por %p93, %p94
      %s97 = sadd.s32 %s96, 1
      %p100 = scmp.eq.s32.totalorder %s13, 1
      %p101 = scmp.ne.s32.totalorder %s96, %s98
      %p102 = scmp.eq.s32.totalorder %s13, 0
      %p103 = por %p101, %p102
      %p104 = scmp.ne.s32.totalorder %s96, %s98
      %p105 = scmp.eq.s32.totalorder %s18, 1
      %p106 = por %p104, %p105
      %p107 = scmp.ne.s32.totalorder %s98, %s99
      %p108 = scmp.eq.s32.totalorder %s18, 0
      %p109 = por %p107, %p108
      %p110 = scmp.ne.s32.totalorder %s98, %s99
      %p111 = scmp.eq.s32.totalorder %s19, 1
      %p112 = por %p110, %p111
      %p114 = scmp.ne.s32.totalorder %s99, %s113
      %p115 = scmp.eq.s32.totalorder %s19, 0
      %p116 = por %p114, %p115
      %s118 = sadd.s32 %s117, 1
      %p121 = scmp.eq.s32.totalorder %s13, 1
      %p122 = scmp.ne.s32.totalorder %s117, %s119
      %p123 = scmp.eq.s32.totalorder %s13, 0
      %p124 = por %p122, %p123
      %p125 = scmp.ne.s32.totalorder %s117, %s119
      %p126 = scmp.eq.s32.totalorder %s18, 1
      %p127 = por %p125, %p126
      %p128 = scmp.ne.s32.totalorder %s119, %s120
      %p129 = scmp.eq.s32.totalorder %s18, 0
      %p130 = por %p128, %p129
      %p131 = scmp.ne.s32.totalorder %s119, %s120
      %p132 = scmp.eq.s32.totalorder %s19, 1
      %p133 = por %p131, %p132
      %p135 = scmp.ne.s32.totalorder %s120, %s134
      %p136 = scmp.eq.s32.totalorder %s19, 0
      %p137 = por %p135, %p136
      %s138 = ssub.s32 %s20, %s39
      %s139 = ssub.s32 %s21, %s35
      %s140 = sor.u32 %s138, %s139
      %p141 = scmp.eq.s32.totalorder %s140, 0
      %s143 = sadd.s32 %s142, 1
      %s144 = scalar_select %p141, %s142, %s143
      %p147 = pneg %p141
      %p148 = scmp.eq.s32.totalorder %s13, 1
      %p149 = por %p147, %p148
      %p150 = scmp.ne.s32.totalorder %s142, %s145
      %p151 = scmp.eq.s32.totalorder %s13, 0
      %p152 = por %p150, %p151
      %p153 = scmp.ne.s32.totalorder %s142, %s145
      %p154 = scmp.eq.s32.totalorder %s18, 1
      %p155 = por %p153, %p154
      %p156 = scmp.ne.s32.totalorder %s145, %s146
      %p157 = scmp.eq.s32.totalorder %s18, 0
      %p158 = por %p156, %p157
      %p159 = scmp.ne.s32.totalorder %s145, %s146
      %p160 = scmp.eq.s32.totalorder %s19, 1
      %p161 = por %p159, %p160
      %p163 = scmp.ne.s32.totalorder %s146, %s162
      %p164 = scmp.eq.s32.totalorder %s19, 0
      %p165 = por %p163, %p164
      %p166 = scmp.le.s32.totalorder 1, %s13
      %p167 = scmp.lt.s32.totalorder %s13, 3
      %p168 = pnand %p166, %p167
      %p169 = pneg %p168
      // Predicated region
      $region9: #{tpu_custom_call.1} parent=5 // pred_check
        _
      $region10: #{tpu_custom_call.1} parent=5 // pred_check_branch
        %171 = sbr.rel (%p168) target = $region12
      $region11: #{tpu_custom_call.1} parent=5 // pred_region
        %s172 = ssub.s32 %s13, 1
        // Predicated region
        $region13: #{tpu_custom_call.1} parent=11 // pred_check
          %p173 = pneg %p109
        $region14: #{tpu_custom_call.1} parent=11 // pred_check_branch
          %175 = sbr.rel (%p173) target = $region16
        $region15: #{tpu_custom_call.1} parent=11 // pred_region
          _
        $region16: #{tpu_custom_call.1} parent=11 // pred_fallthru
          _
        // Predicated region
        $region17: #{tpu_custom_call.1} parent=11 // pred_check
          %p176 = pneg %p130
        $region18: #{tpu_custom_call.1} parent=11 // pred_check_branch
          %178 = sbr.rel (%p176) target = $region20
        $region19: #{tpu_custom_call.1} parent=11 // pred_region
          _
        $region20: #{tpu_custom_call.1} parent=11 // pred_fallthru
          _
      $region12: #{tpu_custom_call.1} parent=5 // pred_fallthru
        _
      %p179 = scmp.lt.s32.totalorder %s13, 2
      // Predicated region
      $region21: #{tpu_custom_call.1} parent=5 // pred_check
        %p180 = pneg %p179
      $region22: #{tpu_custom_call.1} parent=5 // pred_check_branch
        %182 = sbr.rel (%p180) target = $region24
      $region23: #{tpu_custom_call.1} parent=5 // pred_region
        // Predicated region
        $region25: #{tpu_custom_call.1} parent=23 // pred_check
          %p183 = pneg %p54
        $region26: #{tpu_custom_call.1} parent=23 // pred_check_branch
          %185 = sbr.rel (%p183) target = $region28
        $region27: #{tpu_custom_call.1} parent=23 // pred_region
          %p186 = scmp.lt.s32.totalorder %s20, 1
          %s187 = scalar_select %p186, %s20, 1
          %p188 = scmp.lt.s32.totalorder %s21, 0
          %s189 = scalar_select %p188, %s21, 0
          %s190 = sadd.s32 %s189, %s187
          %s191 = smul.addr %s190, 8
          %s192 = scalar_lea.vmem %s0, %s191
        $region28: #{tpu_custom_call.1} parent=23 // pred_fallthru
          _
        // Predicated region
        $region29: #{tpu_custom_call.1} parent=23 // pred_check
          %p193 = pneg %p82
        $region30: #{tpu_custom_call.1} parent=23 // pred_check_branch
          %195 = sbr.rel (%p193) target = $region32
        $region31: #{tpu_custom_call.1} parent=23 // pred_region
          %p196 = scmp.lt.s32.totalorder %s20, 1
          %s197 = scalar_select %p196, %s20, 1
          %p198 = scmp.lt.s32.totalorder %s22, 0
          %s199 = scalar_select %p198, %s22, 0
          %s200 = sadd.s32 %s199, %s197
          %s201 = smul.addr %s200, 8
          %s202 = scalar_lea.vmem %s1, %s201
        $region32: #{tpu_custom_call.1} parent=23 // pred_fallthru
          _
      $region24: #{tpu_custom_call.1} parent=5 // pred_fallthru
        _
      %p203 = scmp.le.s32.totalorder 1, %s13
      %p204 = scmp.lt.s32.totalorder %s13, 3
      %p205 = pnand %p203, %p204
      %p206 = pneg %p205
      // Predicated region
      $region33: #{tpu_custom_call.1} parent=5 // pred_check
        _
      $region34: #{tpu_custom_call.1} parent=5 // pred_check_branch
        %208 = sbr.rel (%p205) target = $region36
      $region35: #{tpu_custom_call.1} parent=5 // pred_region
        %s209 = ssub.s32 %s13, 1
        %p210 = scmp.lt.s32.totalorder %s23, 1
        %s211 = scalar_select %p210, %s23, 1
        %p212 = scmp.lt.s32.totalorder %s24, 0
        %s213 = scalar_select %p212, %s24, 0
        %s214 = sadd.s32 %s213, %s211
        %s215 = smul.addr %s214, 8
        %s216 = scalar_lea.vmem %s0, %s215
        %p217 = pneg %p60
        %p218 = pneg %p57
        %p219 = scmp.lt.s32.totalorder %s23, 1
        %s220 = scalar_select %p219, %s23, 1
        %p221 = scmp.lt.s32.totalorder %s25, 0
        %s222 = scalar_select %p221, %s25, 0
        %s223 = sadd.s32 %s222, %s220
        %s224 = smul.addr %s223, 8
        %s225 = scalar_lea.vmem %s1, %s224
        %p226 = pneg %p88
        %p227 = pneg %p85
        %p228 = pneg %p109
        %p229 = pneg %p106
        %p230 = pneg %p130
        %p231 = pneg %p127
        %p232 = pneg %p158
        %p233 = pneg %p155
        %s234 = sand.u32 %s145, 1
        %s235 = scalar_lea.sflag [#allocation7], %s234
        %s236 = sand.u32 %s145, 1
        %s237 = smul.addr %s236, 8
        %s238 = scalar_lea.vmem [#allocation6], %s237
        %p239 = scmp.lt.s32.totalorder %s23, 1
        %s240 = scalar_select %p239, %s23, 1
        %p241 = scmp.lt.s32.totalorder %s24, 0
        %s242 = scalar_select %p241, %s24, 0
        %s243 = sadd.s32 %s242, %s240
        %s244 = smul.addr %s243, 8
        %s245 = scalar_lea.vmem %s0, %s244
        %p246 = scmp.lt.s32.totalorder %s23, 1
        %s247 = scalar_select %p246, %s23, 1
        %p248 = scmp.lt.s32.totalorder %s25, 0
        %s249 = scalar_select %p248, %s25, 0
        %s250 = sadd.s32 %s249, %s247
        %s251 = smul.addr %s250, 8
        %s252 = scalar_lea.vmem %s1, %s251
        %v253 = vld [vmem:[%s252] sm:$0xff]
        %p254 = scmp.eq.s32.totalorder %s25, 0
        // Predicated region
        $region37: #{tpu_custom_call.1} parent=35 // pred_check
          %p255 = pneg %p254
        $region38: #{tpu_custom_call.1} parent=35 // pred_check_branch
          %257 = sbr.rel (%p255) target = $region40
        $region39: #{tpu_custom_call.1} parent=35 // pred_region
          %vm258 = vcmask 7168
          %259 = vst.msk [vmem:[#allocation3] sm:$0xff] %vm258, -inf
          %260 = vst.msk [vmem:[#allocation3 + $0x8] sm:$0xff] %vm258, -inf
          %261 = vst.msk [vmem:[#allocation4] sm:$0xff] %vm258, 0.0
          %262 = vst.msk [vmem:[#allocation4 + $0x8] sm:$0xff] %vm258, 0.0
          %vm263 = vcmask 130048
          %264 = vst.msk [vmem:[#allocation5] sm:$0xff] %vm263, 0.0
          %265 = vst.msk [vmem:[#allocation5 + $0x8] sm:$0xff] %vm263, 0.0
          %v266 = vld [vmem:[%s245] sm:$0xff]
          %v267 = vld [vmem:[%s2] sm:$0xff]
          %v268 = vld [vmem:[%s2 + $0x8] sm:$0xff]
          %v269 = vld [vmem:[%s2 + $0x10] sm:$0xff]
          %v270 = vld [vmem:[%s2 + $0x18] sm:$0xff]
          %vm271 = vcmask 261120
          %v273 = vsel %vm271, %v266, 0
          %275 = vmatprep.subr.mxu0 0.0
          %276 = vmatpush1.msra.mxu0 0.0
          %277 = vmatprep.subr.mxu0 0.0
          %278 = vmatpush1.msra.mxu0 0.0
          %279 = vmatprep.subr.mxu0 0.0
          %280 = vmatpush1.msra.mxu0 0.0
          %281 = vmatprep.subr.mxu0 0.0
          %282 = vmatpush1.msra.mxu0 0.0
          %283 = vmatprep.subr.mxu0 0.0
          %284 = vmatpush1.msra.mxu0 0.0
          %285 = vmatprep.subr.mxu0 0.0
          %286 = vmatpush1.msra.mxu0 0.0
          %287 = vmatprep.subr.mxu0 0.0
          %288 = vmatpush1.msra.mxu0 0.0
          %289 = vmatprep.subr.mxu0 0.0
          %290 = vmatpush1.msra.mxu0 0.0
          %291 = vmatprep.subr.mxu0 0.0
          %292 = vmatpush1.msra.mxu0 0.0
          %293 = vmatprep.subr.mxu0 0.0
          %294 = vmatpush1.msra.mxu0 0.0
          %295 = vmatprep.subr.mxu0 0.0
          %296 = vmatpush1.msra.mxu0 0.0
          %297 = vmatprep.subr.mxu0 0.0
          %298 = vmatpush1.msra.mxu0 0.0
          %299 = vmatprep.subr.mxu0 0.0
          %300 = vmatpush1.msra.mxu0 %v270
          %301 = vmatprep.subr.mxu0 0.0
          %302 = vmatpush1.msra.mxu0 %v269
          %303 = vmatprep.subr.mxu0 0.0
          %304 = vmatpush1.msra.mxu0 %v268
          %305 = vmatprep.subr.mxu0 0.0
          %306 = vmatpush1.msra.mxu0 %v267
          %307 = vmatprep.subr.mxu0 0.0
          %308 = vmatpush2.msra.mxu0 0.0
          %309 = vmatprep.subr.mxu0 0.0
          %310 = vmatpush2.msra.mxu0 0.0
          %311 = vmatprep.subr.mxu0 0.0
          %312 = vmatpush2.msra.mxu0 0.0
          %313 = vmatprep.subr.mxu0 0.0
          %314 = vmatpush2.msra.mxu0 0.0
          %315 = vmatprep.subr.mxu0 0.0
          %316 = vmatpush2.msra.mxu0 0.0
          %317 = vmatprep.subr.mxu0 0.0
          %318 = vmatpush2.msra.mxu0 0.0
          %319 = vmatprep.subr.mxu0 0.0
          %320 = vmatpush2.msra.mxu0 0.0
          %321 = vmatprep.subr.mxu0 0.0
          %322 = vmatpush2.msra.mxu0 0.0
          %323 = vmatprep.subr.mxu0 0.0
          %324 = vmatpush2.msra.mxu0 0.0
          %325 = vmatprep.subr.mxu0 0.0
          %326 = vmatpush2.msra.mxu0 0.0
          %327 = vmatprep.subr.mxu0 0.0
          %328 = vmatpush2.msra.mxu0 0.0
          %329 = vmatprep.subr.mxu0 0.0
          %330 = vmatpush2.msra.mxu0 0.0
          %331 = vmatprep.subr.mxu0 0.0
          %332 = vmatpush2.msra.mxu0 0.0
          %333 = vmatprep.subr.mxu0 0.0
          %334 = vmatpush2.msra.mxu0 0.0
          %335 = vmatprep.subr.mxu0 0.0
          %336 = vmatpush2.msra.mxu0 0.0
          %337 = vmatprep.subr.mxu0 0.0
          %338 = vmatpush2.msra.mxu0 0.0
          %339 = vmatprep.mubr.f32.mxu0 0.0
          %340 = vmatmul.mubr.f32.gmra.mxu0 %v273
          %v341 = vpop.f32.mrf.mxu0
          %v342 = vadd.f32 0.0, %v341
          %v343 = vpop.f32.mrf.mxu0
          %344 = vdwg.mxu0
          %v345 = vmul.f32 %v342, 0.25
          %346 = vst.msk [vmem:[#allocation2] sm:$0xff] %vm263, %v345
          %s347 = scalar_lea.vmem %s2, 32
          %v348 = vld [vmem:[%s347] sm:$0xff]
          %v349 = vld [vmem:[%s347 + $0x8] sm:$0xff]
          %v350 = vld [vmem:[%s347 + $0x10] sm:$0xff]
          %v351 = vld [vmem:[%s347 + $0x18] sm:$0xff]
          %352 = vmatprep.subr.mxu0 0.0
          %353 = vmatpush1.msra.mxu0 0.0
          %354 = vmatprep.subr.mxu0 0.0
          %355 = vmatpush1.msra.mxu0 0.0
          %356 = vmatprep.subr.mxu0 0.0
          %357 = vmatpush1.msra.mxu0 0.0
          %358 = vmatprep.subr.mxu0 0.0
          %359 = vmatpush1.msra.mxu0 0.0
          %360 = vmatprep.subr.mxu0 0.0
          %361 = vmatpush1.msra.mxu0 0.0
          %362 = vmatprep.subr.mxu0 0.0
          %363 = vmatpush1.msra.mxu0 0.0
          %364 = vmatprep.subr.mxu0 0.0
          %365 = vmatpush1.msra.mxu0 0.0
          %366 = vmatprep.subr.mxu0 0.0
          %367 = vmatpush1.msra.mxu0 0.0
          %368 = vmatprep.subr.mxu0 0.0
          %369 = vmatpush1.msra.mxu0 0.0
          %370 = vmatprep.subr.mxu0 0.0
          %371 = vmatpush1.msra.mxu0 0.0
          %372 = vmatprep.subr.mxu0 0.0
          %373 = vmatpush1.msra.mxu0 0.0
          %374 = vmatprep.subr.mxu0 0.0
          %375 = vmatpush1.msra.mxu0 0.0
          %376 = vmatprep.subr.mxu0 0.0
          %377 = vmatpush1.msra.mxu0 %v351
          %378 = vmatprep.subr.mxu0 0.0
          %379 = vmatpush1.msra.mxu0 %v350
          %380 = vmatprep.subr.mxu0 0.0
          %381 = vmatpush1.msra.mxu0 %v349
          %382 = vmatprep.subr.mxu0 0.0
          %383 = vmatpush1.msra.mxu0 %v348
          %384 = vmatprep.subr.mxu0 0.0
          %385 = vmatpush2.msra.mxu0 0.0
          %386 = vmatprep.subr.mxu0 0.0
          %387 = vmatpush2.msra.mxu0 0.0
          %388 = vmatprep.subr.mxu0 0.0
          %389 = vmatpush2.msra.mxu0 0.0
          %390 = vmatprep.subr.mxu0 0.0
          %391 = vmatpush2.msra.mxu0 0.0
          %392 = vmatprep.subr.mxu0 0.0
          %393 = vmatpush2.msra.mxu0 0.0
          %394 = vmatprep.subr.mxu0 0.0
          %395 = vmatpush2.msra.mxu0 0.0
          %396 = vmatprep.subr.mxu0 0.0
          %397 = vmatpush2.msra.mxu0 0.0
          %398 = vmatprep.subr.mxu0 0.0
          %399 = vmatpush2.msra.mxu0 0.0
          %400 = vmatprep.subr.mxu0 0.0
          %401 = vmatpush2.msra.mxu0 0.0
          %402 = vmatprep.subr.mxu0 0.0
          %403 = vmatpush2.msra.mxu0 0.0
          %404 = vmatprep.subr.mxu0 0.0
          %405 = vmatpush2.msra.mxu0 0.0
          %406 = vmatprep.subr.mxu0 0.0
          %407 = vmatpush2.msra.mxu0 0.0
          %408 = vmatprep.subr.mxu0 0.0
          %409 = vmatpush2.msra.mxu0 0.0
          %410 = vmatprep.subr.mxu0 0.0
          %411 = vmatpush2.msra.mxu0 0.0
          %412 = vmatprep.subr.mxu0 0.0
          %413 = vmatpush2.msra.mxu0 0.0
          %414 = vmatprep.subr.mxu0 0.0
          %415 = vmatpush2.msra.mxu0 0.0
          %416 = vmatprep.mubr.f32.mxu0 0.0
          %417 = vmatmul.mubr.f32.gmra.mxu0 %v273
          %v418 = vpop.f32.mrf.mxu0
          %v419 = vadd.f32 0.0, %v418
          %v420 = vpop.f32.mrf.mxu0
          %421 = vdwg.mxu0
          %v422 = vmul.f32 %v419, 0.25
          %s423 = scalar_lea.vmem [#allocation2], 8
          %424 = vst.msk [vmem:[%s423] sm:$0xff] %vm263, %v422
        $region40: #{tpu_custom_call.1} parent=35 // pred_fallthru
          _
        %s425 = scalar_lea.vmem %s2, 64
        %v426 = vld [vmem:[%s425] sm:$0xff]
        %v427 = vld [vmem:[%s425 + $0x8] sm:$0xff]
        %v428 = vld [vmem:[%s425 + $0x10] sm:$0xff]
        %v429 = vld [vmem:[%s425 + $0x18] sm:$0xff]
        %s430 = scalar_lea.vmem %s2, 128
        %v431 = vld [vmem:[%s430] sm:$0xff]
        %v432 = vld [vmem:[%s430 + $0x8] sm:$0xff]
        %v433 = vld [vmem:[%s430 + $0x10] sm:$0xff]
        %v434 = vld [vmem:[%s430 + $0x18] sm:$0xff]
        %vm435 = vcmask 261120
        %v437 = vsel %vm435, %v253, 0
        %439 = vmatprep.subr.mxu0 0.0
        %440 = vmatpush1.msra.mxu0 0.0
        %441 = vmatprep.subr.mxu0 0.0
        %442 = vmatpush1.msra.mxu0 0.0
        %443 = vmatprep.subr.mxu0 0.0
        %444 = vmatpush1.msra.mxu0 0.0
        %445 = vmatprep.subr.mxu0 0.0
        %446 = vmatpush1.msra.mxu0 0.0
        %447 = vmatprep.subr.mxu0 0.0
        %448 = vmatpush1.msra.mxu0 0.0
        %449 = vmatprep.subr.mxu0 0.0
        %450 = vmatpush1.msra.mxu0 0.0
        %451 = vmatprep.subr.mxu0 0.0
        %452 = vmatpush1.msra.mxu0 0.0
        %453 = vmatprep.subr.mxu0 0.0
        %454 = vmatpush1.msra.mxu0 0.0
        %455 = vmatprep.subr.mxu0 0.0
        %456 = vmatpush1.msra.mxu0 0.0
        %457 = vmatprep.subr.mxu0 0.0
        %458 = vmatpush1.msra.mxu0 0.0
        %459 = vmatprep.subr.mxu0 0.0
        %460 = vmatpush1.msra.mxu0 0.0
        %461 = vmatprep.subr.mxu0 0.0
        %462 = vmatpush1.msra.mxu0 0.0
        %463 = vmatprep.subr.mxu0 0.0
        %464 = vmatpush1.msra.mxu0 %v429
        %465 = vmatprep.subr.mxu0 0.0
        %466 = vmatpush1.msra.mxu0 %v428
        %467 = vmatprep.subr.mxu0 0.0
        %468 = vmatpush1.msra.mxu0 %v427
        %469 = vmatprep.subr.mxu0 0.0
        %470 = vmatpush1.msra.mxu0 %v426
        %471 = vmatprep.subr.mxu0 0.0
        %472 = vmatpush2.msra.mxu0 0.0
        %473 = vmatprep.subr.mxu0 0.0
        %474 = vmatpush2.msra.mxu0 0.0
        %475 = vmatprep.subr.mxu0 0.0
        %476 = vmatpush2.msra.mxu0 0.0
        %477 = vmatprep.subr.mxu0 0.0
        %478 = vmatpush2.msra.mxu0 0.0
        %479 = vmatprep.subr.mxu0 0.0
        %480 = vmatpush2.msra.mxu0 0.0
        %481 = vmatprep.subr.mxu0 0.0
        %482 = vmatpush2.msra.mxu0 0.0
        %483 = vmatprep.subr.mxu0 0.0
        %484 = vmatpush2.msra.mxu0 0.0
        %485 = vmatprep.subr.mxu0 0.0
        %486 = vmatpush2.msra.mxu0 0.0
        %487 = vmatprep.subr.mxu0 0.0
        %488 = vmatpush2.msra.mxu0 0.0
        %489 = vmatprep.subr.mxu0 0.0
        %490 = vmatpush2.msra.mxu0 0.0
        %491 = vmatprep.subr.mxu0 0.0
        %492 = vmatpush2.msra.mxu0 0.0
        %493 = vmatprep.subr.mxu0 0.0
        %494 = vmatpush2.msra.mxu0 0.0
        %495 = vmatprep.subr.mxu0 0.0
        %496 = vmatpush2.msra.mxu0 0.0
        %497 = vmatprep.subr.mxu0 0.0
        %498 = vmatpush2.msra.mxu0 0.0
        %499 = vmatprep.subr.mxu0 0.0
        %500 = vmatpush2.msra.mxu0 0.0
        %501 = vmatprep.subr.mxu0 0.0
        %502 = vmatpush2.msra.mxu0 0.0
        %503 = vmatprep.mubr.f32.mxu0 0.0
        %504 = vmatmul.mubr.f32.gmra.mxu0 %v437
        %v505 = vpop.f32.mrf.mxu0
        %v506 = vadd.f32 0.0, %v505
        %v507 = vpop.f32.mrf.mxu0
        %508 = vdwg.mxu0
        %509 = vmatprep.subr.mxu0 0.0
        %510 = vmatpush1.msra.mxu0 0.0
        %511 = vmatprep.subr.mxu0 0.0
        %512 = vmatpush1.msra.mxu0 0.0
        %513 = vmatprep.subr.mxu0 0.0
        %514 = vmatpush1.msra.mxu0 0.0
        %515 = vmatprep.subr.mxu0 0.0
        %516 = vmatpush1.msra.mxu0 0.0
        %517 = vmatprep.subr.mxu0 0.0
        %518 = vmatpush1.msra.mxu0 0.0
        %519 = vmatprep.subr.mxu0 0.0
        %520 = vmatpush1.msra.mxu0 0.0
        %521 = vmatprep.subr.mxu0 0.0
        %522 = vmatpush1.msra.mxu0 0.0
        %523 = vmatprep.subr.mxu0 0.0
        %524 = vmatpush1.msra.mxu0 0.0
        %525 = vmatprep.subr.mxu0 0.0
        %526 = vmatpush1.msra.mxu0 0.0
        %527 = vmatprep.subr.mxu0 0.0
        %528 = vmatpush1.msra.mxu0 0.0
        %529 = vmatprep.subr.mxu0 0.0
        %530 = vmatpush1.msra.mxu0 0.0
        %531 = vmatprep.subr.mxu0 0.0
        %532 = vmatpush1.msra.mxu0 0.0
        %533 = vmatprep.subr.mxu0 0.0
        %534 = vmatpush1.msra.mxu0 %v434
        %535 = vmatprep.subr.mxu0 0.0
        %536 = vmatpush1.msra.mxu0 %v433
        %537 = vmatprep.subr.mxu0 0.0
        %538 = vmatpush1.msra.mxu0 %v432
        %539 = vmatprep.subr.mxu0 0.0
        %540 = vmatpush1.msra.mxu0 %v431
        %541 = vmatprep.subr.mxu0 0.0
        %542 = vmatpush2.msra.mxu0 0.0
        %543 = vmatprep.subr.mxu0 0.0
        %544 = vmatpush2.msra.mxu0 0.0
        %545 = vmatprep.subr.mxu0 0.0
        %546 = vmatpush2.msra.mxu0 0.0
        %547 = vmatprep.subr.mxu0 0.0
        %548 = vmatpush2.msra.mxu0 0.0
        %549 = vmatprep.subr.mxu0 0.0
        %550 = vmatpush2.msra.mxu0 0.0
        %551 = vmatprep.subr.mxu0 0.0
        %552 = vmatpush2.msra.mxu0 0.0
        %553 = vmatprep.subr.mxu0 0.0
        %554 = vmatpush2.msra.mxu0 0.0
        %555 = vmatprep.subr.mxu0 0.0
        %556 = vmatpush2.msra.mxu0 0.0
        %557 = vmatprep.subr.mxu0 0.0
        %558 = vmatpush2.msra.mxu0 0.0
        %559 = vmatprep.subr.mxu0 0.0
        %560 = vmatpush2.msra.mxu0 0.0
        %561 = vmatprep.subr.mxu0 0.0
        %562 = vmatpush2.msra.mxu0 0.0
        %563 = vmatprep.subr.mxu0 0.0
        %564 = vmatpush2.msra.mxu0 0.0
        %565 = vmatprep.subr.mxu0 0.0
        %566 = vmatpush2.msra.mxu0 0.0
        %567 = vmatprep.subr.mxu0 0.0
        %568 = vmatpush2.msra.mxu0 0.0
        %569 = vmatprep.subr.mxu0 0.0
        %570 = vmatpush2.msra.mxu0 0.0
        %571 = vmatprep.subr.mxu0 0.0
        %572 = vmatpush2.msra.mxu0 0.0
        %573 = vmatprep.mubr.f32.mxu0 0.0
        %574 = vmatmul.mubr.f32.gmra.mxu0 %v437
        %v575 = vpop.f32.mrf.mxu0
        %v576 = vadd.f32 0.0, %v575
        %v577 = vpop.f32.mrf.mxu0
        %578 = vdwg.mxu0
        %v579 = vld [vmem:[#allocation2] sm:$0xff]
        %vm580 = vcmask 130048
        %v582 = vsel %vm580, %v579, 0
        %v585 = vsel %vm580, %v506, 0
        %587 = vmatprep.subr.mxu0 0.0
        %588 = vmatpush1.xpose.msra.mxu0 0.0
        %589 = vmatprep.subr.mxu0 0.0
        %590 = vmatpush1.xpose.msra.mxu0 0.0
        %591 = vmatprep.subr.mxu0 0.0
        %592 = vmatpush1.xpose.msra.mxu0 0.0
        %593 = vmatprep.subr.mxu0 0.0
        %594 = vmatpush1.xpose.msra.mxu0 0.0
        %595 = vmatprep.subr.mxu0 0.0
        %596 = vmatpush1.xpose.msra.mxu0 0.0
        %597 = vmatprep.subr.mxu0 0.0
        %598 = vmatpush1.xpose.msra.mxu0 0.0
        %599 = vmatprep.subr.mxu0 0.0
        %600 = vmatpush1.xpose.msra.mxu0 0.0
        %601 = vmatprep.subr.mxu0 0.0
        %602 = vmatpush1.xpose.msra.mxu0 0.0
        %603 = vmatprep.subr.mxu0 0.0
        %604 = vmatpush1.xpose.msra.mxu0 0.0
        %605 = vmatprep.subr.mxu0 0.0
        %606 = vmatpush1.xpose.msra.mxu0 0.0
        %607 = vmatprep.subr.mxu0 0.0
        %608 = vmatpush1.xpose.msra.mxu0 0.0
        %609 = vmatprep.subr.mxu0 0.0
        %610 = vmatpush1.xpose.msra.mxu0 0.0
        %611 = vmatprep.subr.mxu0 0.0
        %612 = vmatpush1.xpose.msra.mxu0 0.0
        %613 = vmatprep.subr.mxu0 0.0
        %614 = vmatpush1.xpose.msra.mxu0 0.0
        %615 = vmatprep.subr.mxu0 0.0
        %616 = vmatpush1.xpose.msra.mxu0 0.0
        %617 = vmatprep.subr.mxu0 0.0
        %618 = vmatpush1.xpose.msra.mxu0 %v585
        %619 = vmatprep.subr.mxu0 0.0
        %620 = vmatpush2.xpose.msra.mxu0 0.0
        %621 = vmatprep.subr.mxu0 0.0
        %622 = vmatpush2.xpose.msra.mxu0 0.0
        %623 = vmatprep.subr.mxu0 0.0
        %624 = vmatpush2.xpose.msra.mxu0 0.0
        %625 = vmatprep.subr.mxu0 0.0
        %626 = vmatpush2.xpose.msra.mxu0 0.0
        %627 = vmatprep.subr.mxu0 0.0
        %628 = vmatpush2.xpose.msra.mxu0 0.0
        %629 = vmatprep.subr.mxu0 0.0
        %630 = vmatpush2.xpose.msra.mxu0 0.0
        %631 = vmatprep.subr.mxu0 0.0
        %632 = vmatpush2.xpose.msra.mxu0 0.0
        %633 = vmatprep.subr.mxu0 0.0
        %634 = vmatpush2.xpose.msra.mxu0 0.0
        %635 = vmatprep.subr.mxu0 0.0
        %636 = vmatpush2.xpose.msra.mxu0 0.0
        %637 = vmatprep.subr.mxu0 0.0
        %638 = vmatpush2.xpose.msra.mxu0 0.0
        %639 = vmatprep.subr.mxu0 0.0
        %640 = vmatpush2.xpose.msra.mxu0 0.0
        %641 = vmatprep.subr.mxu0 0.0
        %642 = vmatpush2.xpose.msra.mxu0 0.0
        %643 = vmatprep.subr.mxu0 0.0
        %644 = vmatpush2.xpose.msra.mxu0 0.0
        %645 = vmatprep.subr.mxu0 0.0
        %646 = vmatpush2.xpose.msra.mxu0 0.0
        %647 = vmatprep.subr.mxu0 0.0
        %648 = vmatpush2.xpose.msra.mxu0 0.0
        %649 = vmatprep.subr.mxu0 0.0
        %650 = vmatpush2.xpose.msra.mxu0 0.0
        %651 = vmatprep.mubr.f32.mxu0 0.0
        %652 = vmatmul.mubr.f32.gmra.mxu0 %v582
        %v653 = vpop.f32.mrf.mxu0
        %v654 = vadd.f32 0.0, %v653
        %v655 = vpop.f32.mrf.mxu0
        %656 = vdwg.mxu0
        %v657 = vld [vmem:[#allocation3] sm:$0xff]
        %vm658 = vcmask 64512
        %v659 = vsel %vm658, %v654, -inf
        %660 = vmax.xlane.f32.xlu0 %v659
        %v661 = vpop.xlane.xlu0 %660
        %v662 = vmax.f32 %v657, %v661
        %v663 = vsub.f32 %v657, %v662
        %v664 = vmul.f32 %v663, 1.442695
        %v665 = vpow.pop %v664
        %667 = vset.pattern.permute.xlu0 0
        %668 = vperm.xlu0 %667, %v662
        %v669 = vpop.permute.xlu0 %668
        %v671 = vsub.f32 %v654, %v669
        %v672 = vmul.f32 %v671, 1.442695
        %v673 = vpow.pop %v672
        %v674 = vld [vmem:[#allocation4] sm:$0xff]
        %v675 = vmul.f32 %v665, %v674
        %v676 = vsel %vm658, %v673, 0.0
        %677 = vadd.xlane.f32.xlu0 %v676
        %v678 = vpop.xlane.xlu0 %677
        %v679 = vadd.f32 %v675, %v678
        %vm680 = vcmask 7168
        %681 = vst.msk [vmem:[#allocation4] sm:$0xff] %vm680, %v679
        %v682 = vld [vmem:[#allocation5] sm:$0xff]
        %684 = vset.pattern.permute.xlu0 0
        %685 = vperm.xlu0 %684, %v665
        %v686 = vpop.permute.xlu0 %685
        %v688 = vmul.f32 %v686, %v682
        %v690 = vsel %vm658, %v673, 0
        %692 = vmatprep.subr.mxu0 0.0
        %693 = vmatpush1.msra.mxu0 0.0
        %694 = vmatprep.subr.mxu0 0.0
        %695 = vmatpush1.msra.mxu0 0.0
        %696 = vmatprep.subr.mxu0 0.0
        %697 = vmatpush1.msra.mxu0 0.0
        %698 = vmatprep.subr.mxu0 0.0
        %699 = vmatpush1.msra.mxu0 0.0
        %700 = vmatprep.subr.mxu0 0.0
        %701 = vmatpush1.msra.mxu0 0.0
        %702 = vmatprep.subr.mxu0 0.0
        %703 = vmatpush1.msra.mxu0 0.0
        %704 = vmatprep.subr.mxu0 0.0
        %705 = vmatpush1.msra.mxu0 0.0
        %706 = vmatprep.subr.mxu0 0.0
        %707 = vmatpush1.msra.mxu0 0.0
        %708 = vmatprep.subr.mxu0 0.0
        %709 = vmatpush1.msra.mxu0 0.0
        %710 = vmatprep.subr.mxu0 0.0
        %711 = vmatpush1.msra.mxu0 0.0
        %712 = vmatprep.subr.mxu0 0.0
        %713 = vmatpush1.msra.mxu0 0.0
        %714 = vmatprep.subr.mxu0 0.0
        %715 = vmatpush1.msra.mxu0 0.0
        %716 = vmatprep.subr.mxu0 0.0
        %717 = vmatpush1.msra.mxu0 0.0
        %718 = vmatprep.subr.mxu0 0.0
        %719 = vmatpush1.msra.mxu0 0.0
        %720 = vmatprep.subr.mxu0 0.0
        %721 = vmatpush1.msra.mxu0 0.0
        %722 = vmatprep.subr.mxu0 0.0
        %723 = vmatpush1.msra.mxu0 %v576
        %724 = vmatprep.subr.mxu0 0.0
        %725 = vmatpush2.msra.mxu0 0.0
        %726 = vmatprep.subr.mxu0 0.0
        %727 = vmatpush2.msra.mxu0 0.0
        %728 = vmatprep.subr.mxu0 0.0
        %729 = vmatpush2.msra.mxu0 0.0
        %730 = vmatprep.subr.mxu0 0.0
        %731 = vmatpush2.msra.mxu0 0.0
        %732 = vmatprep.subr.mxu0 0.0
        %733 = vmatpush2.msra.mxu0 0.0
        %734 = vmatprep.subr.mxu0 0.0
        %735 = vmatpush2.msra.mxu0 0.0
        %736 = vmatprep.subr.mxu0 0.0
        %737 = vmatpush2.msra.mxu0 0.0
        %738 = vmatprep.subr.mxu0 0.0
        %739 = vmatpush2.msra.mxu0 0.0
        %740 = vmatprep.subr.mxu0 0.0
        %741 = vmatpush2.msra.mxu0 0.0
        %742 = vmatprep.subr.mxu0 0.0
        %743 = vmatpush2.msra.mxu0 0.0
        %744 = vmatprep.subr.mxu0 0.0
        %745 = vmatpush2.msra.mxu0 0.0
        %746 = vmatprep.subr.mxu0 0.0
        %747 = vmatpush2.msra.mxu0 0.0
        %748 = vmatprep.subr.mxu0 0.0
        %749 = vmatpush2.msra.mxu0 0.0
        %750 = vmatprep.subr.mxu0 0.0
        %751 = vmatpush2.msra.mxu0 0.0
        %752 = vmatprep.subr.mxu0 0.0
        %753 = vmatpush2.msra.mxu0 0.0
        %754 = vmatprep.subr.mxu0 0.0
        %755 = vmatpush2.msra.mxu0 0.0
        %756 = vmatprep.mubr.f32.mxu0 0.0
        %757 = vmatmul.mubr.f32.gmra.mxu0 %v690
        %v758 = vpop.f32.mrf.mxu0
        %v759 = vadd.f32 0.0, %v758
        %v760 = vpop.f32.mrf.mxu0
        %761 = vdwg.mxu0
        %v762 = vadd.f32 %v688, %v759
        %763 = vst.msk [vmem:[#allocation5] sm:$0xff] %vm580, %v762
        %764 = vst.msk [vmem:[#allocation3] sm:$0xff] %vm680, %v662
        %s765 = scalar_lea.vmem %s2, 96
        %v766 = vld [vmem:[%s765] sm:$0xff]
        %v767 = vld [vmem:[%s765 + $0x8] sm:$0xff]
        %v768 = vld [vmem:[%s765 + $0x10] sm:$0xff]
        %v769 = vld [vmem:[%s765 + $0x18] sm:$0xff]
        %s770 = scalar_lea.vmem %s2, 160
        %v771 = vld [vmem:[%s770] sm:$0xff]
        %v772 = vld [vmem:[%s770 + $0x8] sm:$0xff]
        %v773 = vld [vmem:[%s770 + $0x10] sm:$0xff]
        %v774 = vld [vmem:[%s770 + $0x18] sm:$0xff]
        %775 = vmatprep.subr.mxu0 0.0
        %776 = vmatpush1.msra.mxu0 0.0
        %777 = vmatprep.subr.mxu0 0.0
        %778 = vmatpush1.msra.mxu0 0.0
        %779 = vmatprep.subr.mxu0 0.0
        %780 = vmatpush1.msra.mxu0 0.0
        %781 = vmatprep.subr.mxu0 0.0
        %782 = vmatpush1.msra.mxu0 0.0
        %783 = vmatprep.subr.mxu0 0.0
        %784 = vmatpush1.msra.mxu0 0.0
        %785 = vmatprep.subr.mxu0 0.0
        %786 = vmatpush1.msra.mxu0 0.0
        %787 = vmatprep.subr.mxu0 0.0
        %788 = vmatpush1.msra.mxu0 0.0
        %789 = vmatprep.subr.mxu0 0.0
        %790 = vmatpush1.msra.mxu0 0.0
        %791 = vmatprep.subr.mxu0 0.0
        %792 = vmatpush1.msra.mxu0 0.0
        %793 = vmatprep.subr.mxu0 0.0
        %794 = vmatpush1.msra.mxu0 0.0
        %795 = vmatprep.subr.mxu0 0.0
        %796 = vmatpush1.msra.mxu0 0.0
        %797 = vmatprep.subr.mxu0 0.0
        %798 = vmatpush1.msra.mxu0 0.0
        %799 = vmatprep.subr.mxu0 0.0
        %800 = vmatpush1.msra.mxu0 %v769
        %801 = vmatprep.subr.mxu0 0.0
        %802 = vmatpush1.msra.mxu0 %v768
        %803 = vmatprep.subr.mxu0 0.0
        %804 = vmatpush1.msra.mxu0 %v767
        %805 = vmatprep.subr.mxu0 0.0
        %806 = vmatpush1.msra.mxu0 %v766
        %807 = vmatprep.subr.mxu0 0.0
        %808 = vmatpush2.msra.mxu0 0.0
        %809 = vmatprep.subr.mxu0 0.0
        %810 = vmatpush2.msra.mxu0 0.0
        %811 = vmatprep.subr.mxu0 0.0
        %812 = vmatpush2.msra.mxu0 0.0
        %813 = vmatprep.subr.mxu0 0.0
        %814 = vmatpush2.msra.mxu0 0.0
        %815 = vmatprep.subr.mxu0 0.0
        %816 = vmatpush2.msra.mxu0 0.0
        %817 = vmatprep.subr.mxu0 0.0
        %818 = vmatpush2.msra.mxu0 0.0
        %819 = vmatprep.subr.mxu0 0.0
        %820 = vmatpush2.msra.mxu0 0.0
        %821 = vmatprep.subr.mxu0 0.0
        %822 = vmatpush2.msra.mxu0 0.0
        %823 = vmatprep.subr.mxu0 0.0
        %824 = vmatpush2.msra.mxu0 0.0
        %825 = vmatprep.subr.mxu0 0.0
        %826 = vmatpush2.msra.mxu0 0.0
        %827 = vmatprep.subr.mxu0 0.0
        %828 = vmatpush2.msra.mxu0 0.0
        %829 = vmatprep.subr.mxu0 0.0
        %830 = vmatpush2.msra.mxu0 0.0
        %831 = vmatprep.subr.mxu0 0.0
        %832 = vmatpush2.msra.mxu0 0.0
        %833 = vmatprep.subr.mxu0 0.0
        %834 = vmatpush2.msra.mxu0 0.0
        %835 = vmatprep.subr.mxu0 0.0
        %836 = vmatpush2.msra.mxu0 0.0
        %837 = vmatprep.subr.mxu0 0.0
        %838 = vmatpush2.msra.mxu0 0.0
        %839 = vmatprep.mubr.f32.mxu0 0.0
        %840 = vmatmul.mubr.f32.gmra.mxu0 %v437
        %v841 = vpop.f32.mrf.mxu0
        %v842 = vadd.f32 0.0, %v841
        %v843 = vpop.f32.mrf.mxu0
        %844 = vdwg.mxu0
        %845 = vmatprep.subr.mxu0 0.0
        %846 = vmatpush1.msra.mxu0 0.0
        %847 = vmatprep.subr.mxu0 0.0
        %848 = vmatpush1.msra.mxu0 0.0
        %849 = vmatprep.subr.mxu0 0.0
        %850 = vmatpush1.msra.mxu0 0.0
        %851 = vmatprep.subr.mxu0 0.0
        %852 = vmatpush1.msra.mxu0 0.0
        %853 = vmatprep.subr.mxu0 0.0
        %854 = vmatpush1.msra.mxu0 0.0
        %855 = vmatprep.subr.mxu0 0.0
        %856 = vmatpush1.msra.mxu0 0.0
        %857 = vmatprep.subr.mxu0 0.0
        %858 = vmatpush1.msra.mxu0 0.0
        %859 = vmatprep.subr.mxu0 0.0
        %860 = vmatpush1.msra.mxu0 0.0
        %861 = vmatprep.subr.mxu0 0.0
        %862 = vmatpush1.msra.mxu0 0.0
        %863 = vmatprep.subr.mxu0 0.0
        %864 = vmatpush1.msra.mxu0 0.0
        %865 = vmatprep.subr.mxu0 0.0
        %866 = vmatpush1.msra.mxu0 0.0
        %867 = vmatprep.subr.mxu0 0.0
        %868 = vmatpush1.msra.mxu0 0.0
        %869 = vmatprep.subr.mxu0 0.0
        %870 = vmatpush1.msra.mxu0 %v774
        %871 = vmatprep.subr.mxu0 0.0
        %872 = vmatpush1.msra.mxu0 %v773
        %873 = vmatprep.subr.mxu0 0.0
        %874 = vmatpush1.msra.mxu0 %v772
        %875 = vmatprep.subr.mxu0 0.0
        %876 = vmatpush1.msra.mxu0 %v771
        %877 = vmatprep.subr.mxu0 0.0
        %878 = vmatpush2.msra.mxu0 0.0
        %879 = vmatprep.subr.mxu0 0.0
        %880 = vmatpush2.msra.mxu0 0.0
        %881 = vmatprep.subr.mxu0 0.0
        %882 = vmatpush2.msra.mxu0 0.0
        %883 = vmatprep.subr.mxu0 0.0
        %884 = vmatpush2.msra.mxu0 0.0
        %885 = vmatprep.subr.mxu0 0.0
        %886 = vmatpush2.msra.mxu0 0.0
        %887 = vmatprep.subr.mxu0 0.0
        %888 = vmatpush2.msra.mxu0 0.0
        %889 = vmatprep.subr.mxu0 0.0
        %890 = vmatpush2.msra.mxu0 0.0
        %891 = vmatprep.subr.mxu0 0.0
        %892 = vmatpush2.msra.mxu0 0.0
        %893 = vmatprep.subr.mxu0 0.0
        %894 = vmatpush2.msra.mxu0 0.0
        %895 = vmatprep.subr.mxu0 0.0
        %896 = vmatpush2.msra.mxu0 0.0
        %897 = vmatprep.subr.mxu0 0.0
        %898 = vmatpush2.msra.mxu0 0.0
        %899 = vmatprep.subr.mxu0 0.0
        %900 = vmatpush2.msra.mxu0 0.0
        %901 = vmatprep.subr.mxu0 0.0
        %902 = vmatpush2.msra.mxu0 0.0
        %903 = vmatprep.subr.mxu0 0.0
        %904 = vmatpush2.msra.mxu0 0.0
        %905 = vmatprep.subr.mxu0 0.0
        %906 = vmatpush2.msra.mxu0 0.0
        %907 = vmatprep.subr.mxu0 0.0
        %908 = vmatpush2.msra.mxu0 0.0
        %909 = vmatprep.mubr.f32.mxu0 0.0
        %910 = vmatmul.mubr.f32.gmra.mxu0 %v437
        %v911 = vpop.f32.mrf.mxu0
        %v912 = vadd.f32 0.0, %v911
        %v913 = vpop.f32.mrf.mxu0
        %914 = vdwg.mxu0
        %s915 = scalar_lea.vmem [#allocation2], 8
        %v916 = vld [vmem:[%s915] sm:$0xff]
        %v918 = vsel %vm580, %v916, 0
        %v921 = vsel %vm580, %v842, 0
        %923 = vmatprep.subr.mxu0 0.0
        %924 = vmatpush1.xpose.msra.mxu0 0.0
        %925 = vmatprep.subr.mxu0 0.0
        %926 = vmatpush1.xpose.msra.mxu0 0.0
        %927 = vmatprep.subr.mxu0 0.0
        %928 = vmatpush1.xpose.msra.mxu0 0.0
        %929 = vmatprep.subr.mxu0 0.0
        %930 = vmatpush1.xpose.msra.mxu0 0.0
        %931 = vmatprep.subr.mxu0 0.0
        %932 = vmatpush1.xpose.msra.mxu0 0.0
        %933 = vmatprep.subr.mxu0 0.0
        %934 = vmatpush1.xpose.msra.mxu0 0.0
        %935 = vmatprep.subr.mxu0 0.0
        %936 = vmatpush1.xpose.msra.mxu0 0.0
        %937 = vmatprep.subr.mxu0 0.0
        %938 = vmatpush1.xpose.msra.mxu0 0.0
        %939 = vmatprep.subr.mxu0 0.0
        %940 = vmatpush1.xpose.msra.mxu0 0.0
        %941 = vmatprep.subr.mxu0 0.0
        %942 = vmatpush1.xpose.msra.mxu0 0.0
        %943 = vmatprep.subr.mxu0 0.0
        %944 = vmatpush1.xpose.msra.mxu0 0.0
        %945 = vmatprep.subr.mxu0 0.0
        %946 = vmatpush1.xpose.msra.mxu0 0.0
        %947 = vmatprep.subr.mxu0 0.0
        %948 = vmatpush1.xpose.msra.mxu0 0.0
        %949 = vmatprep.subr.mxu0 0.0
        %950 = vmatpush1.xpose.msra.mxu0 0.0
        %951 = vmatprep.subr.mxu0 0.0
        %952 = vmatpush1.xpose.msra.mxu0 0.0
        %953 = vmatprep.subr.mxu0 0.0
        %954 = vmatpush1.xpose.msra.mxu0 %v921
        %955 = vmatprep.subr.mxu0 0.0
        %956 = vmatpush2.xpose.msra.mxu0 0.0
        %957 = vmatprep.subr.mxu0 0.0
        %958 = vmatpush2.xpose.msra.mxu0 0.0
        %959 = vmatprep.subr.mxu0 0.0
        %960 = vmatpush2.xpose.msra.mxu0 0.0
        %961 = vmatprep.subr.mxu0 0.0
        %962 = vmatpush2.xpose.msra.mxu0 0.0
        %963 = vmatprep.subr.mxu0 0.0
        %964 = vmatpush2.xpose.msra.mxu0 0.0
        %965 = vmatprep.subr.mxu0 0.0
        %966 = vmatpush2.xpose.msra.mxu0 0.0
        %967 = vmatprep.subr.mxu0 0.0
        %968 = vmatpush2.xpose.msra.mxu0 0.0
        %969 = vmatprep.subr.mxu0 0.0
        %970 = vmatpush2.xpose.msra.mxu0 0.0
        %971 = vmatprep.subr.mxu0 0.0
        %972 = vmatpush2.xpose.msra.mxu0 0.0
        %973 = vmatprep.subr.mxu0 0.0
        %974 = vmatpush2.xpose.msra.mxu0 0.0
        %975 = vmatprep.subr.mxu0 0.0
        %976 = vmatpush2.xpose.msra.mxu0 0.0
        %977 = vmatprep.subr.mxu0 0.0
        %978 = vmatpush2.xpose.msra.mxu0 0.0
        %979 = vmatprep.subr.mxu0 0.0
        %980 = vmatpush2.xpose.msra.mxu0 0.0
        %981 = vmatprep.subr.mxu0 0.0
        %982 = vmatpush2.xpose.msra.mxu0 0.0
        %983 = vmatprep.subr.mxu0 0.0
        %984 = vmatpush2.xpose.msra.mxu0 0.0
        %985 = vmatprep.subr.mxu0 0.0
        %986 = vmatpush2.xpose.msra.mxu0 0.0
        %987 = vmatprep.mubr.f32.mxu0 0.0
        %988 = vmatmul.mubr.f32.gmra.mxu0 %v918
        %v989 = vpop.f32.mrf.mxu0
        %v990 = vadd.f32 0.0, %v989
        %v991 = vpop.f32.mrf.mxu0
        %992 = vdwg.mxu0
        %s993 = scalar_lea.vmem [#allocation3], 8
        %v994 = vld [vmem:[%s993] sm:$0xff]
        %v995 = vsel %vm658, %v990, -inf
        %996 = vmax.xlane.f32.xlu0 %v995
        %v997 = vpop.xlane.xlu0 %996
        %v998 = vmax.f32 %v994, %v997
        %v999 = vsub.f32 %v994, %v998
        %v1000 = vmul.f32 %v999, 1.442695
        %v1001 = vpow.pop %v1000
        %1003 = vset.pattern.permute.xlu0 0
        %1004 = vperm.xlu0 %1003, %v998
        %v1005 = vpop.permute.xlu0 %1004
        %v1007 = vsub.f32 %v990, %v1005
        %v1008 = vmul.f32 %v1007, 1.442695
        %v1009 = vpow.pop %v1008
        %s1010 = scalar_lea.vmem [#allocation4], 8
        %v1011 = vld [vmem:[%s1010] sm:$0xff]
        %v1012 = vmul.f32 %v1001, %v1011
        %v1013 = vsel %vm658, %v1009, 0.0
        %1014 = vadd.xlane.f32.xlu0 %v1013
        %v1015 = vpop.xlane.xlu0 %1014
        %v1016 = vadd.f32 %v1012, %v1015
        %1017 = vst.msk [vmem:[%s1010] sm:$0xff] %vm680, %v1016
        %s1018 = scalar_lea.vmem [#allocation5], 8
        %v1019 = vld [vmem:[%s1018] sm:$0xff]
        %1021 = vset.pattern.permute.xlu0 0
        %1022 = vperm.xlu0 %1021, %v1001
        %v1023 = vpop.permute.xlu0 %1022
        %v1025 = vmul.f32 %v1023, %v1019
        %v1027 = vsel %vm658, %v1009, 0
        %1029 = vmatprep.subr.mxu0 0.0
        %1030 = vmatpush1.msra.mxu0 0.0
        %1031 = vmatprep.subr.mxu0 0.0
        %1032 = vmatpush1.msra.mxu0 0.0
        %1033 = vmatprep.subr.mxu0 0.0
        %1034 = vmatpush1.msra.mxu0 0.0
        %1035 = vmatprep.subr.mxu0 0.0
        %1036 = vmatpush1.msra.mxu0 0.0
        %1037 = vmatprep.subr.mxu0 0.0
        %1038 = vmatpush1.msra.mxu0 0.0
        %1039 = vmatprep.subr.mxu0 0.0
        %1040 = vmatpush1.msra.mxu0 0.0
        %1041 = vmatprep.subr.mxu0 0.0
        %1042 = vmatpush1.msra.mxu0 0.0
        %1043 = vmatprep.subr.mxu0 0.0
        %1044 = vmatpush1.msra.mxu0 0.0
        %1045 = vmatprep.subr.mxu0 0.0
        %1046 = vmatpush1.msra.mxu0 0.0
        %1047 = vmatprep.subr.mxu0 0.0
        %1048 = vmatpush1.msra.mxu0 0.0
        %1049 = vmatprep.subr.mxu0 0.0
        %1050 = vmatpush1.msra.mxu0 0.0
        %1051 = vmatprep.subr.mxu0 0.0
        %1052 = vmatpush1.msra.mxu0 0.0
        %1053 = vmatprep.subr.mxu0 0.0
        %1054 = vmatpush1.msra.mxu0 0.0
        %1055 = vmatprep.subr.mxu0 0.0
        %1056 = vmatpush1.msra.mxu0 0.0
        %1057 = vmatprep.subr.mxu0 0.0
        %1058 = vmatpush1.msra.mxu0 0.0
        %1059 = vmatprep.subr.mxu0 0.0
        %1060 = vmatpush1.msra.mxu0 %v912
        %1061 = vmatprep.subr.mxu0 0.0
        %1062 = vmatpush2.msra.mxu0 0.0
        %1063 = vmatprep.subr.mxu0 0.0
        %1064 = vmatpush2.msra.mxu0 0.0
        %1065 = vmatprep.subr.mxu0 0.0
        %1066 = vmatpush2.msra.mxu0 0.0
        %1067 = vmatprep.subr.mxu0 0.0
        %1068 = vmatpush2.msra.mxu0 0.0
        %1069 = vmatprep.subr.mxu0 0.0
        %1070 = vmatpush2.msra.mxu0 0.0
        %1071 = vmatprep.subr.mxu0 0.0
        %1072 = vmatpush2.msra.mxu0 0.0
        %1073 = vmatprep.subr.mxu0 0.0
        %1074 = vmatpush2.msra.mxu0 0.0
        %1075 = vmatprep.subr.mxu0 0.0
        %1076 = vmatpush2.msra.mxu0 0.0
        %1077 = vmatprep.subr.mxu0 0.0
        %1078 = vmatpush2.msra.mxu0 0.0
        %1079 = vmatprep.subr.mxu0 0.0
        %1080 = vmatpush2.msra.mxu0 0.0
        %1081 = vmatprep.subr.mxu0 0.0
        %1082 = vmatpush2.msra.mxu0 0.0
        %1083 = vmatprep.subr.mxu0 0.0
        %1084 = vmatpush2.msra.mxu0 0.0
        %1085 = vmatprep.subr.mxu0 0.0
        %1086 = vmatpush2.msra.mxu0 0.0
        %1087 = vmatprep.subr.mxu0 0.0
        %1088 = vmatpush2.msra.mxu0 0.0
        %1089 = vmatprep.subr.mxu0 0.0
        %1090 = vmatpush2.msra.mxu0 0.0
        %1091 = vmatprep.subr.mxu0 0.0
        %1092 = vmatpush2.msra.mxu0 0.0
        %1093 = vmatprep.mubr.f32.mxu0 0.0
        %1094 = vmatmul.mubr.f32.gmra.mxu0 %v1027
        %v1095 = vpop.f32.mrf.mxu0
        %v1096 = vadd.f32 0.0, %v1095
        %v1097 = vpop.f32.mrf.mxu0
        %1098 = vdwg.mxu0
        %v1099 = vadd.f32 %v1025, %v1096
        %1100 = vst.msk [vmem:[%s1018] sm:$0xff] %vm580, %v1099
        %1101 = vst.msk [vmem:[%s993] sm:$0xff] %vm680, %v998
        // Predicated region
        $region41: #{tpu_custom_call.1} parent=35 // pred_check
          %p1102 = pneg %p254
        $region42: #{tpu_custom_call.1} parent=35 // pred_check_branch
          %1104 = sbr.rel (%p1102) target = $region44
        $region43: #{tpu_custom_call.1} parent=35 // pred_region
          %v1105 = vld [vmem:[#allocation4] sm:$0xff]
          %v1106 = vrcp.pop %v1105
          %v1107 = vld [vmem:[#allocation5] sm:$0xff]
          %1109 = vset.pattern.permute.xlu0 0
          %1110 = vperm.xlu0 %1109, %v1106
          %v1111 = vpop.permute.xlu0 %1110
          %v1113 = vmul.f32 %v1107, %v1111
          %v1114 = vld [vmem:[%s3] sm:$0xff]
          %v1115 = vld [vmem:[%s3 + $0x8] sm:$0xff]
          %v1116 = vld [vmem:[%s1010] sm:$0xff]
          %v1117 = vrcp.pop %v1116
          %v1118 = vld [vmem:[%s1018] sm:$0xff]
          %1120 = vset.pattern.permute.xlu0 0
          %1121 = vperm.xlu0 %1120, %v1117
          %v1122 = vpop.permute.xlu0 %1121
          %v1124 = vmul.f32 %v1118, %v1122
          %s1125 = scalar_lea.vmem %s3, 16
          %v1126 = vld [vmem:[%s1125] sm:$0xff]
          %v1127 = vld [vmem:[%s1125 + $0x8] sm:$0xff]
          %v1129 = vsel %vm580, %v1124, 0
          %1131 = vmatprep.subr.mxu0 0.0
          %1132 = vmatpush1.msra.mxu0 0.0
          %1133 = vmatprep.subr.mxu0 0.0
          %1134 = vmatpush1.msra.mxu0 0.0
          %1135 = vmatprep.subr.mxu0 0.0
          %1136 = vmatpush1.msra.mxu0 0.0
          %1137 = vmatprep.subr.mxu0 0.0
          %1138 = vmatpush1.msra.mxu0 0.0
          %1139 = vmatprep.subr.mxu0 0.0
          %1140 = vmatpush1.msra.mxu0 0.0
          %1141 = vmatprep.subr.mxu0 0.0
          %1142 = vmatpush1.msra.mxu0 0.0
          %1143 = vmatprep.subr.mxu0 0.0
          %1144 = vmatpush1.msra.mxu0 0.0
          %1145 = vmatprep.subr.mxu0 0.0
          %1146 = vmatpush1.msra.mxu0 0.0
          %1147 = vmatprep.subr.mxu0 0.0
          %1148 = vmatpush1.msra.mxu0 0.0
          %1149 = vmatprep.subr.mxu0 0.0
          %1150 = vmatpush1.msra.mxu0 0.0
          %1151 = vmatprep.subr.mxu0 0.0
          %1152 = vmatpush1.msra.mxu0 0.0
          %1153 = vmatprep.subr.mxu0 0.0
          %1154 = vmatpush1.msra.mxu0 0.0
          %1155 = vmatprep.subr.mxu0 0.0
          %1156 = vmatpush1.msra.mxu0 0.0
          %1157 = vmatprep.subr.mxu0 0.0
          %1158 = vmatpush1.msra.mxu0 0.0
          %1159 = vmatprep.subr.mxu0 0.0
          %1160 = vmatpush1.msra.mxu0 %v1127
          %1161 = vmatprep.subr.mxu0 0.0
          %1162 = vmatpush1.msra.mxu0 %v1126
          %1163 = vmatprep.subr.mxu0 0.0
          %1164 = vmatpush2.msra.mxu0 0.0
          %1165 = vmatprep.subr.mxu0 0.0
          %1166 = vmatpush2.msra.mxu0 0.0
          %1167 = vmatprep.subr.mxu0 0.0
          %1168 = vmatpush2.msra.mxu0 0.0
          %1169 = vmatprep.subr.mxu0 0.0
          %1170 = vmatpush2.msra.mxu0 0.0
          %1171 = vmatprep.subr.mxu0 0.0
          %1172 = vmatpush2.msra.mxu0 0.0
          %1173 = vmatprep.subr.mxu0 0.0
          %1174 = vmatpush2.msra.mxu0 0.0
          %1175 = vmatprep.subr.mxu0 0.0
          %1176 = vmatpush2.msra.mxu0 0.0
          %1177 = vmatprep.subr.mxu0 0.0
          %1178 = vmatpush2.msra.mxu0 0.0
          %1179 = vmatprep.subr.mxu0 0.0
          %1180 = vmatpush2.msra.mxu0 0.0
          %1181 = vmatprep.subr.mxu0 0.0
          %1182 = vmatpush2.msra.mxu0 0.0
          %1183 = vmatprep.subr.mxu0 0.0
          %1184 = vmatpush2.msra.mxu0 0.0
          %1185 = vmatprep.subr.mxu0 0.0
          %1186 = vmatpush2.msra.mxu0 0.0
          %1187 = vmatprep.subr.mxu0 0.0
          %1188 = vmatpush2.msra.mxu0 0.0
          %1189 = vmatprep.subr.mxu0 0.0
          %1190 = vmatpush2.msra.mxu0 0.0
          %1191 = vmatprep.subr.mxu0 0.0
          %1192 = vmatpush2.msra.mxu0 0.0
          %1193 = vmatprep.subr.mxu0 0.0
          %1194 = vmatpush2.msra.mxu0 0.0
          %1195 = vmatprep.mubr.f32.mxu0 0.0
          %1196 = vmatmul.mubr.f32.gmra.mxu0 %v1129
          %v1197 = vpop.f32.mrf.mxu0
          %v1198 = vadd.f32 0.0, %v1197
          %v1199 = vpop.f32.mrf.mxu0
          %1200 = vdwg.mxu0
          %v1202 = vsel %vm580, %v1113, 0
          %1204 = vmatprep.subr.mxu0 0.0
          %1205 = vmatpush1.msra.mxu0 0.0
          %1206 = vmatprep.subr.mxu0 0.0
          %1207 = vmatpush1.msra.mxu0 0.0
          %1208 = vmatprep.subr.mxu0 0.0
          %1209 = vmatpush1.msra.mxu0 0.0
          %1210 = vmatprep.subr.mxu0 0.0
          %1211 = vmatpush1.msra.mxu0 0.0
          %1212 = vmatprep.subr.mxu0 0.0
          %1213 = vmatpush1.msra.mxu0 0.0
          %1214 = vmatprep.subr.mxu0 0.0
          %1215 = vmatpush1.msra.mxu0 0.0
          %1216 = vmatprep.subr.mxu0 0.0
          %1217 = vmatpush1.msra.mxu0 0.0
          %1218 = vmatprep.subr.mxu0 0.0
          %1219 = vmatpush1.msra.mxu0 0.0
          %1220 = vmatprep.subr.mxu0 0.0
          %1221 = vmatpush1.msra.mxu0 0.0
          %1222 = vmatprep.subr.mxu0 0.0
          %1223 = vmatpush1.msra.mxu0 0.0
          %1224 = vmatprep.subr.mxu0 0.0
          %1225 = vmatpush1.msra.mxu0 0.0
          %1226 = vmatprep.subr.mxu0 0.0
          %1227 = vmatpush1.msra.mxu0 0.0
          %1228 = vmatprep.subr.mxu0 0.0
          %1229 = vmatpush1.msra.mxu0 0.0
          %1230 = vmatprep.subr.mxu0 0.0
          %1231 = vmatpush1.msra.mxu0 0.0
          %1232 = vmatprep.subr.mxu0 0.0
          %1233 = vmatpush1.msra.mxu0 %v1115
          %1234 = vmatprep.subr.mxu0 0.0
          %1235 = vmatpush1.msra.mxu0 %v1114
          %1236 = vmatprep.subr.mxu0 0.0
          %1237 = vmatpush2.msra.mxu0 0.0
          %1238 = vmatprep.subr.mxu0 0.0
          %1239 = vmatpush2.msra.mxu0 0.0
          %1240 = vmatprep.subr.mxu0 0.0
          %1241 = vmatpush2.msra.mxu0 0.0
          %1242 = vmatprep.subr.mxu0 0.0
          %1243 = vmatpush2.msra.mxu0 0.0
          %1244 = vmatprep.subr.mxu0 0.0
          %1245 = vmatpush2.msra.mxu0 0.0
          %1246 = vmatprep.subr.mxu0 0.0
          %1247 = vmatpush2.msra.mxu0 0.0
          %1248 = vmatprep.subr.mxu0 0.0
          %1249 = vmatpush2.msra.mxu0 0.0
          %1250 = vmatprep.subr.mxu0 0.0
          %1251 = vmatpush2.msra.mxu0 0.0
          %1252 = vmatprep.subr.mxu0 0.0
          %1253 = vmatpush2.msra.mxu0 0.0
          %1254 = vmatprep.subr.mxu0 0.0
          %1255 = vmatpush2.msra.mxu0 0.0
          %1256 = vmatprep.subr.mxu0 0.0
          %1257 = vmatpush2.msra.mxu0 0.0
          %1258 = vmatprep.subr.mxu0 0.0
          %1259 = vmatpush2.msra.mxu0 0.0
          %1260 = vmatprep.subr.mxu0 0.0
          %1261 = vmatpush2.msra.mxu0 0.0
          %1262 = vmatprep.subr.mxu0 0.0
          %1263 = vmatpush2.msra.mxu0 0.0
          %1264 = vmatprep.subr.mxu0 0.0
          %1265 = vmatpush2.msra.mxu0 0.0
          %1266 = vmatprep.subr.mxu0 0.0
          %1267 = vmatpush2.msra.mxu0 0.0
          %1268 = vmatprep.mubr.f32.mxu0 0.0
          %1269 = vmatmul.mubr.f32.gmra.mxu0 %v1202
          %v1270 = vpop.f32.mrf.mxu0
          %v1271 = vadd.f32 %v1198, %v1270
          %v1272 = vpop.f32.mrf.mxu0
          %1273 = vdwg.mxu0
          %1274 = vst.msk [vmem:[%s238] sm:$0xff] %vm435, %v1271
        $region44: #{tpu_custom_call.1} parent=35 // pred_fallthru
          _
        %s1275 = sand.u32 %s145, 1
        %s1276 = scalar_lea.sflag [#allocation7], %s1275
        %s1277 = sand.u32 %s145, 1
        %s1278 = smul.addr %s1277, 8
        %s1279 = scalar_lea.vmem [#allocation6], %s1278
        // Predicated region
        $region45: #{tpu_custom_call.1} parent=35 // pred_check
          %p1280 = pneg %p155
        $region46: #{tpu_custom_call.1} parent=35 // pred_check_branch
          %1282 = sbr.rel (%p1280) target = $region48
        $region47: #{tpu_custom_call.1} parent=35 // pred_region
          %s1284 = ssub.s32 128, 128
          %1285 = vsyncadd %s1276, %s1284
          %s1286 = sadd.s32 %s24, %s23
          %s1287 = smul.addr %s1286, 128
          %s1288 = scalar_lea.hbm %s4, %s1287
          %s1290 = sshll.u32 %s1279, 4
          %s1291 = int_to_ptr.vmem [resolvable:$true] %s1290
          %1293 = dma.vmem_to_hbm [thread:$0]  %s1291, 128, %s1288, %s1276
        $region48: #{tpu_custom_call.1} parent=35 // pred_fallthru
          _
      $region36: #{tpu_custom_call.1} parent=5 // pred_fallthru
        _
      %p1294 = scmp.le.s32.totalorder 2, %s13
      // Predicated region
      $region49: #{tpu_custom_call.1} parent=5 // pred_check
        %p1295 = pneg %p1294
      $region50: #{tpu_custom_call.1} parent=5 // pred_check_branch
        %1297 = sbr.rel (%p1295) target = $region52
      $region51: #{tpu_custom_call.1} parent=5 // pred_region
        %s1298 = ssub.s32 %s13, 2
        // Predicated region
        $region53: #{tpu_custom_call.1} parent=51 // pred_check
          %p1299 = pneg %p161
        $region54: #{tpu_custom_call.1} parent=51 // pred_check_branch
          %1301 = sbr.rel (%p1299) target = $region56
        $region55: #{tpu_custom_call.1} parent=51 // pred_region
          %s1302 = sand.u32 %s146, 1
          %s1303 = scalar_lea.sflag [#allocation7], %s1302
          %s1304 = sand.u32 %s146, 1
          %s1305 = smul.addr %s1304, 8
          %s1306 = scalar_lea.vmem [#allocation6], %s1305
          %1307 = dma.done %s1303, 128
        $region56: #{tpu_custom_call.1} parent=51 // pred_fallthru
          _
      $region52: #{tpu_custom_call.1} parent=5 // pred_fallthru
        _
    $region6: #{tpu_custom_call.1} parent=1 // loop_footer
      %s17 = sadd.s32 1, %s13
    $region7: #{tpu_custom_call.1} parent=1 // loop_footer_branch
      %12 = sbr.rel target = $region3
    $region8: #{tpu_custom_call.1} parent=1 // loop_exit
      _
    %1308 = vsyncpa [#allocation7], 1
    %s1309 = scalar_lea.sflag [#allocation7], 1
    %1310 = vsyncpa %s1309, 1

</llo_original>
